<compile_context>
chip_gen: v7x
topology: tpu7x:2x2x1
jax: 0.10.0
libtpu: 0.0.40
codegen_flags: <defaults>
</compile_context>

<pallas_src>
import jax
import jax.numpy as jnp
from jax import lax
from jax.experimental import pallas as pl
from jax.experimental.pallas import tpu as pltpu  # noqa: F401  (TPU backend)


def qnet_kernel(gi_ref, mask_ref, w_ref, b_ref, out_ref):
    # gi_ref:   (T, B, 3H) precomputed input projections + input biases, gate order [r|z|n]
    # mask_ref: (T, B, H)  1.0 while t < length else 0.0 (pack_padded + last-valid semantics)
    # w_ref:    (H, 3H + H + Vp)  [W_h fused | W_fc1 | W_fc2 lane-padded]
    # b_ref:    (1,  H + H + Vp)  [b_hn | b_fc1 | b_fc2 lane-padded]
    # out_ref:  (B, Vp)
    T, B, H3 = gi_ref.shape
    H = H3 // 3
    Vp = out_ref.shape[1]

    w_all = w_ref[...]
    wh = w_all[:, 0:3 * H]                     # (H, 3H) fused hidden-side gate weights
    w1 = w_all[:, 3 * H:4 * H]                 # (H, H)
    w2 = w_all[:, 4 * H:4 * H + Vp]            # (H, Vp)
    b_all = b_ref[...]
    b_hn = jnp.broadcast_to(b_all[:, 0:H], (B, H))   # hoisted broadcast (used every step)
    b1 = b_all[:, H:2 * H]
    b2 = b_all[:, 2 * H:2 * H + Vp]

    h = jnp.zeros((B, H), jnp.float32)
    # T is small and static -> fully unrolled so MXU push/pop, EUP sigmoid/tanh and
    # VPU blends of adjacent timesteps can interleave.
    for t in range(T):
        gh = jnp.dot(h, wh, preferred_element_type=jnp.float32)   # single (B,H)@(H,3H)
        gi_t = gi_ref[t]                                          # (B, 3H) static slice
        r = jax.nn.sigmoid(gi_t[:, 0:H] + gh[:, 0:H])
        z = jax.nn.sigmoid(gi_t[:, H:2 * H] + gh[:, H:2 * H])
        n = jnp.tanh(gi_t[:, 2 * H:3 * H] + r * (gh[:, 2 * H:3 * H] + b_hn))
        h_new = (1.0 - z) * n + z * h
        m_t = mask_ref[t]                                         # (B, H) constant per step
        h = h + m_t * (h_new - h)            # state frozen once t >= length

    feat = jnp.maximum(h, 0.0)               # F.relu(encoder_forward(...))
    o1 = jnp.dot(feat, w1, preferred_element_type=jnp.float32) + b1
    out_ref[...] = jnp.dot(o1, w2, preferred_element_type=jnp.float32) + b2


def q_net_forward(tokens, lengths, params):
    """tokens: (B, T) int32 padded with 0; lengths: (B,) int32."""
    emb = params["embedding"].astype(jnp.float32)     # (num_nodes+1, E), row 0 zeroed
    B, T = tokens.shape
    H = params["w_hh"].shape[1]
    V = params["w2"].shape[0]
    Vp = ((V + 127) // 128) * 128                     # lane-dense output width

    w_ih, w_hh = params["w_ih"], params["w_hh"]       # torch layout (3H,E),(3H,H), gates [r,z,n]
    b_ih, b_hh = params["b_ih"], params["b_hh"]

    # Fold the input-side projection into the embedding table:
    #   gi[t] = emb[token_t] @ [Wir|Wiz|Win]^T + [b_ir+b_hr, b_iz+b_hz, b_in]
    bi_fused = jnp.concatenate([b_ih[0:H] + b_hh[0:H],
                                b_ih[H:2 * H] + b_hh[H:2 * H],
                                b_ih[2 * H:3 * H]])
    emb_proj = emb @ w_ih.T.astype(jnp.float32) + bi_fused        # (V, 3H)
    gi = jnp.transpose(emb_proj[tokens], (1, 0, 2)).astype(jnp.float32)  # (T, B, 3H)

    # validity mask: h only advances while t < length -> final carry == out[length-1]
    valid = jnp.arange(T, dtype=jnp.int32)[:, None] < lengths[None, :].astype(jnp.int32)
    mask = jnp.broadcast_to(valid[:, :, None], (T, B, H)).astype(jnp.float32)

    # Consolidate all remaining weights / biases into two slabs (fewer DMAs).
    wh_fused = w_hh.T.astype(jnp.float32)                          # (H, 3H)
    w1 = params["w1"].T.astype(jnp.float32)                        # (H, H)
    w2p = jnp.zeros((H, Vp), jnp.float32).at[:, :V].set(params["w2"].T)
    w_slab = jnp.concatenate([wh_fused, w1, w2p], axis=1)          # (H, 3H+H+Vp)

    b2p = jnp.zeros((Vp,), jnp.float32).at[:V].set(params["b2"])
    b_slab = jnp.concatenate([b_hh[2 * H:3 * H], params["b1"], b2p]).reshape(1, -1)

    args = (gi, mask, w_slab, b_slab.astype(jnp.float32))

    def full_spec(a):
        nd = a.ndim
        return pl.BlockSpec(a.shape, lambda i, _nd=nd: (0,) * _nd)

    out_p = pl.pallas_call(
        qnet_kernel,
        grid=(1,),
        in_specs=[full_spec(a) for a in args],
        out_specs=pl.BlockSpec((B, Vp), lambda i: (0, 0)),
        out_shape=jax.ShapeDtypeStruct((B, Vp), jnp.float32),
        compiler_params=pltpu.CompilerParams(dimension_semantics=("arbitrary",)),
    )(*args)
    # TODO(synk): if deployment batch grows, add a "parallel" batch grid axis (v7x 2-TC)
    # and re-derive VMEM tiling against 64 MiB.
    return out_p[:, :V]                                            # drop lane padding


def reference_forward(tokens, lengths, params):
    """Pure-JAX reference mirroring the PyTorch forward (for validation)."""
    emb = params["embedding"]
    x = emb[tokens].astype(jnp.float32)          # (B, T, E)
    H = params["w_hh"].shape[1]
    w_ih, w_hh = params["w_ih"], params["w_hh"]
    b_ih, b_hh = params["b_ih"], params["b_hh"]
    B, T, _ = x.shape

    def step(h, inp):
        x_t, t = inp
        gi = x_t @ w_ih.T + b_ih
        gh = h @ w_hh.T + b_hh
        r = jax.nn.sigmoid(gi[:, :H] + gh[:, :H])
        z = jax.nn.sigmoid(gi[:, H:2 * H] + gh[:, H:2 * H])
        n = jnp.tanh(gi[:, 2 * H:] + r * gh[:, 2 * H:])
        h_new = (1.0 - z) * n + z * h
        return jnp.where((lengths > t)[:, None], h_new, h), None

    h0 = jnp.zeros((B, H), jnp.float32)
    h_last, _ = lax.scan(step, h0, (jnp.transpose(x, (1, 0, 2)), jnp.arange(T)))
    feat = jax.nn.relu(h_last)
    return (feat @ params["w1"].T + params["b1"]) @ params["w2"].T + params["b2"]


def init_params(key, num_nodes, embedding_dim, hidden_dim):
    V, E, H = num_nodes + 1, embedding_dim, hidden_dim
    ks = jax.random.split(key, 9)
    s = 1.0 / jnp.sqrt(jnp.float32(H))
    emb = jax.random.normal(ks[0], (V, E), jnp.float32) * 0.1
    emb = emb.at[0].set(0.0)                     # padding_idx=0
    u = lambda k, shape: jax.random.uniform(k, shape, jnp.float32, -s, s)
    return {
        "embedding": emb,
        "w_ih": u(ks[1], (3 * H, E)),
        "w_hh": u(ks[2], (3 * H, H)),
        "b_ih": u(ks[3], (3 * H,)),
        "b_hh": u(ks[4], (3 * H,)),
        "w1": u(ks[5], (H, H)),
        "b1": u(ks[6], (H,)),
        "w2": u(ks[7], (V, H)),
        "b2": u(ks[8], (V,)),
    }


if __name__ == "__main__":
    # synthetic game/args: num_nodes=10 -> vocab 11, time_horizon=8, emb=hidden=32, batch=2
    num_nodes, T, E, H, B = 10, 8, 32, 32, 2
    key = jax.random.PRNGKey(0)
    kp, kt = jax.random.split(key)
    params = init_params(kp, num_nodes, E, H)

    # obs = [(attacker_history_i, position_i)]: variable-length histories -> padded tokens + lengths
    lengths = jnp.array([5, 8], dtype=jnp.int32)
    tokens = jax.random.randint(kt, (B, T), 1, num_nodes + 1, dtype=jnp.int32)
    pos = jnp.arange(T)[None, :]
    tokens = jnp.where(pos < lengths[:, None], tokens, 0)   # pad with 0 (padding_idx)

    out = jax.block_until_ready(q_net_forward(tokens, lengths, params))
    ref = reference_forward(tokens, lengths, params)
    assert out.shape == (B, num_nodes + 1)
    assert jnp.allclose(out, ref, atol=1e-4, rtol=1e-4), "kernel does not match reference"
    print("KERNEL_OK")
</pallas_src>

<mosaic_0001>
module attributes {stable_mosaic.version = 11 : i64} {
  func.func @qnet_kernel(%arg0: i32, %arg1: memref<8x2x96xf32, #tpu.memory_space<vmem>>, %arg2: memref<8x2x32xf32, #tpu.memory_space<vmem>>, %arg3: memref<32x256xf32, #tpu.memory_space<vmem>>, %arg4: memref<1x192xf32, #tpu.memory_space<vmem>>, %arg5: memref<2x128xf32, #tpu.memory_space<vmem>>) attributes {dimension_semantics = [#tpu.dimension_semantics<arbitrary>], iteration_bounds = array<i64: 1>, scalar_prefetch = 0 : i64, scratch_operands = 0 : i64, tpu.core_type = #tpu.core_type<tc>, window_params = [{pipeline_mode = #tpu.pipeline_mode<synchronous>, transform_indices = @transform_0, window_bounds = array<i64: 8, 2, 96>}, {pipeline_mode = #tpu.pipeline_mode<synchronous>, transform_indices = @transform_1, window_bounds = array<i64: 8, 2, 32>}, {pipeline_mode = #tpu.pipeline_mode<synchronous>, transform_indices = @transform_2, window_bounds = array<i64: 32, 256>}, {pipeline_mode = #tpu.pipeline_mode<synchronous>, transform_indices = @transform_3, window_bounds = array<i64: 1, 192>}, {pipeline_mode = #tpu.pipeline_mode<synchronous>, transform_indices = @transform_4, window_bounds = array<i64: 2, 128>}]} {
    %c0 = arith.constant 0 : index
    %c0_0 = arith.constant 0 : index
    %0 = vector.load %arg3[%c0, %c0_0] : memref<32x256xf32, #tpu.memory_space<vmem>>, vector<32x256xf32>
    %1 = vector.extract_strided_slice %0 {offsets = [0, 0], sizes = [32, 96], strides = [1, 1]} : vector<32x256xf32> to vector<32x96xf32>
    %2 = vector.extract_strided_slice %0 {offsets = [0, 96], sizes = [32, 32], strides = [1, 1]} : vector<32x256xf32> to vector<32x32xf32>
    %3 = vector.extract_strided_slice %0 {offsets = [0, 128], sizes = [32, 128], strides = [1, 1]} : vector<32x256xf32> to vector<32x128xf32>
    %c0_1 = arith.constant 0 : index
    %c0_2 = arith.constant 0 : index
    %4 = vector.load %arg4[%c0_1, %c0_2] : memref<1x192xf32, #tpu.memory_space<vmem>>, vector<1x192xf32>
    %5 = vector.extract_strided_slice %4 {offsets = [0, 0], sizes = [1, 32], strides = [1, 1]} : vector<1x192xf32> to vector<1x32xf32>
    %6 = vector.shape_cast %5 : vector<1x32xf32> to vector<1x32xf32>
    %7 = vector.broadcast %6 : vector<1x32xf32> to vector<2x32xf32>
    %8 = vector.extract_strided_slice %4 {offsets = [0, 32], sizes = [1, 32], strides = [1, 1]} : vector<1x192xf32> to vector<1x32xf32>
    %9 = vector.extract_strided_slice %4 {offsets = [0, 64], sizes = [1, 128], strides = [1, 1]} : vector<1x192xf32> to vector<1x128xf32>
    %cst = arith.constant 0.000000e+00 : f32
    %10 = vector.broadcast %cst : f32 to vector<2x32xf32>
    %cst_3 = arith.constant dense<0.000000e+00> : vector<2x96xf32>
    %11 = tpu.matmul %10, %1, %cst_3 {dimension_numbers = #tpu.dot_dimension_numbers<[1], [0], [0], [1], [0, 0, 1, 1], [], []>} : vector<2x32xf32>, vector<32x96xf32>, vector<2x96xf32> -> vector<2x96xf32>
    %c0_4 = arith.constant 0 : index
    %c0_5 = arith.constant 0 : index
    %c0_6 = arith.constant 0 : index
    %12 = vector.load %arg1[%c0_4, %c0_5, %c0_6] : memref<8x2x96xf32, #tpu.memory_space<vmem>>, vector<1x2x96xf32>
    %13 = vector.shape_cast %12 : vector<1x2x96xf32> to vector<2x96xf32>
    %14 = vector.extract_strided_slice %13 {offsets = [0, 0], sizes = [2, 32], strides = [1, 1]} : vector<2x96xf32> to vector<2x32xf32>
    %15 = vector.extract_strided_slice %11 {offsets = [0, 0], sizes = [2, 32], strides = [1, 1]} : vector<2x96xf32> to vector<2x32xf32>
    %16 = arith.addf %14, %15 : vector<2x32xf32>
    %17 = arith.negf %16 : vector<2x32xf32>
    %18 = math.exp %17 : vector<2x32xf32>
    %cst_7 = arith.constant 1.000000e+00 : f32
    %19 = vector.broadcast %cst_7 : f32 to vector<2x32xf32>
    %20 = arith.addf %19, %18 : vector<2x32xf32>
    %21 = arith.divf %19, %20 : vector<2x32xf32>
    %22 = vector.extract_strided_slice %13 {offsets = [0, 32], sizes = [2, 32], strides = [1, 1]} : vector<2x96xf32> to vector<2x32xf32>
    %23 = vector.extract_strided_slice %11 {offsets = [0, 32], sizes = [2, 32], strides = [1, 1]} : vector<2x96xf32> to vector<2x32xf32>
    %24 = arith.addf %22, %23 : vector<2x32xf32>
    %25 = arith.negf %24 : vector<2x32xf32>
    %26 = math.exp %25 : vector<2x32xf32>
    %cst_8 = arith.constant 1.000000e+00 : f32
    %27 = vector.broadcast %cst_8 : f32 to vector<2x32xf32>
    %28 = arith.addf %27, %26 : vector<2x32xf32>
    %29 = arith.divf %27, %28 : vector<2x32xf32>
    %30 = vector.extract_strided_slice %13 {offsets = [0, 64], sizes = [2, 32], strides = [1, 1]} : vector<2x96xf32> to vector<2x32xf32>
    %31 = vector.extract_strided_slice %11 {offsets = [0, 64], sizes = [2, 32], strides = [1, 1]} : vector<2x96xf32> to vector<2x32xf32>
    %32 = arith.addf %31, %7 : vector<2x32xf32>
    %33 = arith.mulf %21, %32 : vector<2x32xf32>
    %34 = arith.addf %30, %33 : vector<2x32xf32>
    %35 = math.tanh %34 : vector<2x32xf32>
    %cst_9 = arith.constant 1.000000e+00 : f32
    %36 = vector.broadcast %cst_9 : f32 to vector<2x32xf32>
    %37 = arith.subf %36, %29 : vector<2x32xf32>
    %38 = arith.mulf %37, %35 : vector<2x32xf32>
    %39 = arith.mulf %29, %10 : vector<2x32xf32>
    %40 = arith.addf %38, %39 : vector<2x32xf32>
    %c0_10 = arith.constant 0 : index
    %c0_11 = arith.constant 0 : index
    %c0_12 = arith.constant 0 : index
    %41 = vector.load %arg2[%c0_10, %c0_11, %c0_12] : memref<8x2x32xf32, #tpu.memory_space<vmem>>, vector<1x2x32xf32>
    %42 = vector.shape_cast %41 : vector<1x2x32xf32> to vector<2x32xf32>
    %43 = arith.subf %40, %10 : vector<2x32xf32>
    %44 = arith.mulf %42, %43 : vector<2x32xf32>
    %45 = arith.addf %10, %44 : vector<2x32xf32>
    %cst_13 = arith.constant dense<0.000000e+00> : vector<2x96xf32>
    %46 = tpu.matmul %45, %1, %cst_13 {dimension_numbers = #tpu.dot_dimension_numbers<[1], [0], [0], [1], [0, 0, 1, 1], [], []>} : vector<2x32xf32>, vector<32x96xf32>, vector<2x96xf32> -> vector<2x96xf32>
    %c1 = arith.constant 1 : index
    %c0_14 = arith.constant 0 : index
    %c0_15 = arith.constant 0 : index
    %47 = vector.load %arg1[%c1, %c0_14, %c0_15] : memref<8x2x96xf32, #tpu.memory_space<vmem>>, vector<1x2x96xf32>
    %48 = vector.shape_cast %47 : vector<1x2x96xf32> to vector<2x96xf32>
    %49 = vector.extract_strided_slice %48 {offsets = [0, 0], sizes = [2, 32], strides = [1, 1]} : vector<2x96xf32> to vector<2x32xf32>
    %50 = vector.extract_strided_slice %46 {offsets = [0, 0], sizes = [2, 32], strides = [1, 1]} : vector<2x96xf32> to vector<2x32xf32>
    %51 = arith.addf %49, %50 : vector<2x32xf32>
    %52 = arith.negf %51 : vector<2x32xf32>
    %53 = math.exp %52 : vector<2x32xf32>
    %cst_16 = arith.constant 1.000000e+00 : f32
    %54 = vector.broadcast %cst_16 : f32 to vector<2x32xf32>
    %55 = arith.addf %54, %53 : vector<2x32xf32>
    %56 = arith.divf %54, %55 : vector<2x32xf32>
    %57 = vector.extract_strided_slice %48 {offsets = [0, 32], sizes = [2, 32], strides = [1, 1]} : vector<2x96xf32> to vector<2x32xf32>
    %58 = vector.extract_strided_slice %46 {offsets = [0, 32], sizes = [2, 32], strides = [1, 1]} : vector<2x96xf32> to vector<2x32xf32>
    %59 = arith.addf %57, %58 : vector<2x32xf32>
    %60 = arith.negf %59 : vector<2x32xf32>
    %61 = math.exp %60 : vector<2x32xf32>
    %cst_17 = arith.constant 1.000000e+00 : f32
    %62 = vector.broadcast %cst_17 : f32 to vector<2x32xf32>
    %63 = arith.addf %62, %61 : vector<2x32xf32>
    %64 = arith.divf %62, %63 : vector<2x32xf32>
    %65 = vector.extract_strided_slice %48 {offsets = [0, 64], sizes = [2, 32], strides = [1, 1]} : vector<2x96xf32> to vector<2x32xf32>
    %66 = vector.extract_strided_slice %46 {offsets = [0, 64], sizes = [2, 32], strides = [1, 1]} : vector<2x96xf32> to vector<2x32xf32>
    %67 = arith.addf %66, %7 : vector<2x32xf32>
    %68 = arith.mulf %56, %67 : vector<2x32xf32>
    %69 = arith.addf %65, %68 : vector<2x32xf32>
    %70 = math.tanh %69 : vector<2x32xf32>
    %cst_18 = arith.constant 1.000000e+00 : f32
    %71 = vector.broadcast %cst_18 : f32 to vector<2x32xf32>
    %72 = arith.subf %71, %64 : vector<2x32xf32>
    %73 = arith.mulf %72, %70 : vector<2x32xf32>
    %74 = arith.mulf %64, %45 : vector<2x32xf32>
    %75 = arith.addf %73, %74 : vector<2x32xf32>
    %c1_19 = arith.constant 1 : index
    %c0_20 = arith.constant 0 : index
    %c0_21 = arith.constant 0 : index
    %76 = vector.load %arg2[%c1_19, %c0_20, %c0_21] : memref<8x2x32xf32, #tpu.memory_space<vmem>>, vector<1x2x32xf32>
    %77 = vector.shape_cast %76 : vector<1x2x32xf32> to vector<2x32xf32>
    %78 = arith.subf %75, %45 : vector<2x32xf32>
    %79 = arith.mulf %77, %78 : vector<2x32xf32>
    %80 = arith.addf %45, %79 : vector<2x32xf32>
    %cst_22 = arith.constant dense<0.000000e+00> : vector<2x96xf32>
    %81 = tpu.matmul %80, %1, %cst_22 {dimension_numbers = #tpu.dot_dimension_numbers<[1], [0], [0], [1], [0, 0, 1, 1], [], []>} : vector<2x32xf32>, vector<32x96xf32>, vector<2x96xf32> -> vector<2x96xf32>
    %c2 = arith.constant 2 : index
    %c0_23 = arith.constant 0 : index
    %c0_24 = arith.constant 0 : index
    %82 = vector.load %arg1[%c2, %c0_23, %c0_24] : memref<8x2x96xf32, #tpu.memory_space<vmem>>, vector<1x2x96xf32>
    %83 = vector.shape_cast %82 : vector<1x2x96xf32> to vector<2x96xf32>
    %84 = vector.extract_strided_slice %83 {offsets = [0, 0], sizes = [2, 32], strides = [1, 1]} : vector<2x96xf32> to vector<2x32xf32>
    %85 = vector.extract_strided_slice %81 {offsets = [0, 0], sizes = [2, 32], strides = [1, 1]} : vector<2x96xf32> to vector<2x32xf32>
    %86 = arith.addf %84, %85 : vector<2x32xf32>
    %87 = arith.negf %86 : vector<2x32xf32>
    %88 = math.exp %87 : vector<2x32xf32>
    %cst_25 = arith.constant 1.000000e+00 : f32
    %89 = vector.broadcast %cst_25 : f32 to vector<2x32xf32>
    %90 = arith.addf %89, %88 : vector<2x32xf32>
    %91 = arith.divf %89, %90 : vector<2x32xf32>
    %92 = vector.extract_strided_slice %83 {offsets = [0, 32], sizes = [2, 32], strides = [1, 1]} : vector<2x96xf32> to vector<2x32xf32>
    %93 = vector.extract_strided_slice %81 {offsets = [0, 32], sizes = [2, 32], strides = [1, 1]} : vector<2x96xf32> to vector<2x32xf32>
    %94 = arith.addf %92, %93 : vector<2x32xf32>
    %95 = arith.negf %94 : vector<2x32xf32>
    %96 = math.exp %95 : vector<2x32xf32>
    %cst_26 = arith.constant 1.000000e+00 : f32
    %97 = vector.broadcast %cst_26 : f32 to vector<2x32xf32>
    %98 = arith.addf %97, %96 : vector<2x32xf32>
    %99 = arith.divf %97, %98 : vector<2x32xf32>
    %100 = vector.extract_strided_slice %83 {offsets = [0, 64], sizes = [2, 32], strides = [1, 1]} : vector<2x96xf32> to vector<2x32xf32>
    %101 = vector.extract_strided_slice %81 {offsets = [0, 64], sizes = [2, 32], strides = [1, 1]} : vector<2x96xf32> to vector<2x32xf32>
    %102 = arith.addf %101, %7 : vector<2x32xf32>
    %103 = arith.mulf %91, %102 : vector<2x32xf32>
    %104 = arith.addf %100, %103 : vector<2x32xf32>
    %105 = math.tanh %104 : vector<2x32xf32>
    %cst_27 = arith.constant 1.000000e+00 : f32
    %106 = vector.broadcast %cst_27 : f32 to vector<2x32xf32>
    %107 = arith.subf %106, %99 : vector<2x32xf32>
    %108 = arith.mulf %107, %105 : vector<2x32xf32>
    %109 = arith.mulf %99, %80 : vector<2x32xf32>
    %110 = arith.addf %108, %109 : vector<2x32xf32>
    %c2_28 = arith.constant 2 : index
    %c0_29 = arith.constant 0 : index
    %c0_30 = arith.constant 0 : index
    %111 = vector.load %arg2[%c2_28, %c0_29, %c0_30] : memref<8x2x32xf32, #tpu.memory_space<vmem>>, vector<1x2x32xf32>
    %112 = vector.shape_cast %111 : vector<1x2x32xf32> to vector<2x32xf32>
    %113 = arith.subf %110, %80 : vector<2x32xf32>
    %114 = arith.mulf %112, %113 : vector<2x32xf32>
    %115 = arith.addf %80, %114 : vector<2x32xf32>
    %cst_31 = arith.constant dense<0.000000e+00> : vector<2x96xf32>
    %116 = tpu.matmul %115, %1, %cst_31 {dimension_numbers = #tpu.dot_dimension_numbers<[1], [0], [0], [1], [0, 0, 1, 1], [], []>} : vector<2x32xf32>, vector<32x96xf32>, vector<2x96xf32> -> vector<2x96xf32>
    %c3 = arith.constant 3 : index
    %c0_32 = arith.constant 0 : index
    %c0_33 = arith.constant 0 : index
    %117 = vector.load %arg1[%c3, %c0_32, %c0_33] : memref<8x2x96xf32, #tpu.memory_space<vmem>>, vector<1x2x96xf32>
    %118 = vector.shape_cast %117 : vector<1x2x96xf32> to vector<2x96xf32>
    %119 = vector.extract_strided_slice %118 {offsets = [0, 0], sizes = [2, 32], strides = [1, 1]} : vector<2x96xf32> to vector<2x32xf32>
    %120 = vector.extract_strided_slice %116 {offsets = [0, 0], sizes = [2, 32], strides = [1, 1]} : vector<2x96xf32> to vector<2x32xf32>
    %121 = arith.addf %119, %120 : vector<2x32xf32>
    %122 = arith.negf %121 : vector<2x32xf32>
    %123 = math.exp %122 : vector<2x32xf32>
    %cst_34 = arith.constant 1.000000e+00 : f32
    %124 = vector.broadcast %cst_34 : f32 to vector<2x32xf32>
    %125 = arith.addf %124, %123 : vector<2x32xf32>
    %126 = arith.divf %124, %125 : vector<2x32xf32>
    %127 = vector.extract_strided_slice %118 {offsets = [0, 32], sizes = [2, 32], strides = [1, 1]} : vector<2x96xf32> to vector<2x32xf32>
    %128 = vector.extract_strided_slice %116 {offsets = [0, 32], sizes = [2, 32], strides = [1, 1]} : vector<2x96xf32> to vector<2x32xf32>
    %129 = arith.addf %127, %128 : vector<2x32xf32>
    %130 = arith.negf %129 : vector<2x32xf32>
    %131 = math.exp %130 : vector<2x32xf32>
    %cst_35 = arith.constant 1.000000e+00 : f32
    %132 = vector.broadcast %cst_35 : f32 to vector<2x32xf32>
    %133 = arith.addf %132, %131 : vector<2x32xf32>
    %134 = arith.divf %132, %133 : vector<2x32xf32>
    %135 = vector.extract_strided_slice %118 {offsets = [0, 64], sizes = [2, 32], strides = [1, 1]} : vector<2x96xf32> to vector<2x32xf32>
    %136 = vector.extract_strided_slice %116 {offsets = [0, 64], sizes = [2, 32], strides = [1, 1]} : vector<2x96xf32> to vector<2x32xf32>
    %137 = arith.addf %136, %7 : vector<2x32xf32>
    %138 = arith.mulf %126, %137 : vector<2x32xf32>
    %139 = arith.addf %135, %138 : vector<2x32xf32>
    %140 = math.tanh %139 : vector<2x32xf32>
    %cst_36 = arith.constant 1.000000e+00 : f32
    %141 = vector.broadcast %cst_36 : f32 to vector<2x32xf32>
    %142 = arith.subf %141, %134 : vector<2x32xf32>
    %143 = arith.mulf %142, %140 : vector<2x32xf32>
    %144 = arith.mulf %134, %115 : vector<2x32xf32>
    %145 = arith.addf %143, %144 : vector<2x32xf32>
    %c3_37 = arith.constant 3 : index
    %c0_38 = arith.constant 0 : index
    %c0_39 = arith.constant 0 : index
    %146 = vector.load %arg2[%c3_37, %c0_38, %c0_39] : memref<8x2x32xf32, #tpu.memory_space<vmem>>, vector<1x2x32xf32>
    %147 = vector.shape_cast %146 : vector<1x2x32xf32> to vector<2x32xf32>
    %148 = arith.subf %145, %115 : vector<2x32xf32>
    %149 = arith.mulf %147, %148 : vector<2x32xf32>
    %150 = arith.addf %115, %149 : vector<2x32xf32>
    %cst_40 = arith.constant dense<0.000000e+00> : vector<2x96xf32>
    %151 = tpu.matmul %150, %1, %cst_40 {dimension_numbers = #tpu.dot_dimension_numbers<[1], [0], [0], [1], [0, 0, 1, 1], [], []>} : vector<2x32xf32>, vector<32x96xf32>, vector<2x96xf32> -> vector<2x96xf32>
    %c4 = arith.constant 4 : index
    %c0_41 = arith.constant 0 : index
    %c0_42 = arith.constant 0 : index
    %152 = vector.load %arg1[%c4, %c0_41, %c0_42] : memref<8x2x96xf32, #tpu.memory_space<vmem>>, vector<1x2x96xf32>
    %153 = vector.shape_cast %152 : vector<1x2x96xf32> to vector<2x96xf32>
    %154 = vector.extract_strided_slice %153 {offsets = [0, 0], sizes = [2, 32], strides = [1, 1]} : vector<2x96xf32> to vector<2x32xf32>
    %155 = vector.extract_strided_slice %151 {offsets = [0, 0], sizes = [2, 32], strides = [1, 1]} : vector<2x96xf32> to vector<2x32xf32>
    %156 = arith.addf %154, %155 : vector<2x32xf32>
    %157 = arith.negf %156 : vector<2x32xf32>
    %158 = math.exp %157 : vector<2x32xf32>
    %cst_43 = arith.constant 1.000000e+00 : f32
    %159 = vector.broadcast %cst_43 : f32 to vector<2x32xf32>
    %160 = arith.addf %159, %158 : vector<2x32xf32>
    %161 = arith.divf %159, %160 : vector<2x32xf32>
    %162 = vector.extract_strided_slice %153 {offsets = [0, 32], sizes = [2, 32], strides = [1, 1]} : vector<2x96xf32> to vector<2x32xf32>
    %163 = vector.extract_strided_slice %151 {offsets = [0, 32], sizes = [2, 32], strides = [1, 1]} : vector<2x96xf32> to vector<2x32xf32>
    %164 = arith.addf %162, %163 : vector<2x32xf32>
    %165 = arith.negf %164 : vector<2x32xf32>
    %166 = math.exp %165 : vector<2x32xf32>
    %cst_44 = arith.constant 1.000000e+00 : f32
    %167 = vector.broadcast %cst_44 : f32 to vector<2x32xf32>
    %168 = arith.addf %167, %166 : vector<2x32xf32>
    %169 = arith.divf %167, %168 : vector<2x32xf32>
    %170 = vector.extract_strided_slice %153 {offsets = [0, 64], sizes = [2, 32], strides = [1, 1]} : vector<2x96xf32> to vector<2x32xf32>
    %171 = vector.extract_strided_slice %151 {offsets = [0, 64], sizes = [2, 32], strides = [1, 1]} : vector<2x96xf32> to vector<2x32xf32>
    %172 = arith.addf %171, %7 : vector<2x32xf32>
    %173 = arith.mulf %161, %172 : vector<2x32xf32>
    %174 = arith.addf %170, %173 : vector<2x32xf32>
    %175 = math.tanh %174 : vector<2x32xf32>
    %cst_45 = arith.constant 1.000000e+00 : f32
    %176 = vector.broadcast %cst_45 : f32 to vector<2x32xf32>
    %177 = arith.subf %176, %169 : vector<2x32xf32>
    %178 = arith.mulf %177, %175 : vector<2x32xf32>
    %179 = arith.mulf %169, %150 : vector<2x32xf32>
    %180 = arith.addf %178, %179 : vector<2x32xf32>
    %c4_46 = arith.constant 4 : index
    %c0_47 = arith.constant 0 : index
    %c0_48 = arith.constant 0 : index
    %181 = vector.load %arg2[%c4_46, %c0_47, %c0_48] : memref<8x2x32xf32, #tpu.memory_space<vmem>>, vector<1x2x32xf32>
    %182 = vector.shape_cast %181 : vector<1x2x32xf32> to vector<2x32xf32>
    %183 = arith.subf %180, %150 : vector<2x32xf32>
    %184 = arith.mulf %182, %183 : vector<2x32xf32>
    %185 = arith.addf %150, %184 : vector<2x32xf32>
    %cst_49 = arith.constant dense<0.000000e+00> : vector<2x96xf32>
    %186 = tpu.matmul %185, %1, %cst_49 {dimension_numbers = #tpu.dot_dimension_numbers<[1], [0], [0], [1], [0, 0, 1, 1], [], []>} : vector<2x32xf32>, vector<32x96xf32>, vector<2x96xf32> -> vector<2x96xf32>
    %c5 = arith.constant 5 : index
    %c0_50 = arith.constant 0 : index
    %c0_51 = arith.constant 0 : index
    %187 = vector.load %arg1[%c5, %c0_50, %c0_51] : memref<8x2x96xf32, #tpu.memory_space<vmem>>, vector<1x2x96xf32>
    %188 = vector.shape_cast %187 : vector<1x2x96xf32> to vector<2x96xf32>
    %189 = vector.extract_strided_slice %188 {offsets = [0, 0], sizes = [2, 32], strides = [1, 1]} : vector<2x96xf32> to vector<2x32xf32>
    %190 = vector.extract_strided_slice %186 {offsets = [0, 0], sizes = [2, 32], strides = [1, 1]} : vector<2x96xf32> to vector<2x32xf32>
    %191 = arith.addf %189, %190 : vector<2x32xf32>
    %192 = arith.negf %191 : vector<2x32xf32>
    %193 = math.exp %192 : vector<2x32xf32>
    %cst_52 = arith.constant 1.000000e+00 : f32
    %194 = vector.broadcast %cst_52 : f32 to vector<2x32xf32>
    %195 = arith.addf %194, %193 : vector<2x32xf32>
    %196 = arith.divf %194, %195 : vector<2x32xf32>
    %197 = vector.extract_strided_slice %188 {offsets = [0, 32], sizes = [2, 32], strides = [1, 1]} : vector<2x96xf32> to vector<2x32xf32>
    %198 = vector.extract_strided_slice %186 {offsets = [0, 32], sizes = [2, 32], strides = [1, 1]} : vector<2x96xf32> to vector<2x32xf32>
    %199 = arith.addf %197, %198 : vector<2x32xf32>
    %200 = arith.negf %199 : vector<2x32xf32>
    %201 = math.exp %200 : vector<2x32xf32>
    %cst_53 = arith.constant 1.000000e+00 : f32
    %202 = vector.broadcast %cst_53 : f32 to vector<2x32xf32>
    %203 = arith.addf %202, %201 : vector<2x32xf32>
    %204 = arith.divf %202, %203 : vector<2x32xf32>
    %205 = vector.extract_strided_slice %188 {offsets = [0, 64], sizes = [2, 32], strides = [1, 1]} : vector<2x96xf32> to vector<2x32xf32>
    %206 = vector.extract_strided_slice %186 {offsets = [0, 64], sizes = [2, 32], strides = [1, 1]} : vector<2x96xf32> to vector<2x32xf32>
    %207 = arith.addf %206, %7 : vector<2x32xf32>
    %208 = arith.mulf %196, %207 : vector<2x32xf32>
    %209 = arith.addf %205, %208 : vector<2x32xf32>
    %210 = math.tanh %209 : vector<2x32xf32>
    %cst_54 = arith.constant 1.000000e+00 : f32
    %211 = vector.broadcast %cst_54 : f32 to vector<2x32xf32>
    %212 = arith.subf %211, %204 : vector<2x32xf32>
    %213 = arith.mulf %212, %210 : vector<2x32xf32>
    %214 = arith.mulf %204, %185 : vector<2x32xf32>
    %215 = arith.addf %213, %214 : vector<2x32xf32>
    %c5_55 = arith.constant 5 : index
    %c0_56 = arith.constant 0 : index
    %c0_57 = arith.constant 0 : index
    %216 = vector.load %arg2[%c5_55, %c0_56, %c0_57] : memref<8x2x32xf32, #tpu.memory_space<vmem>>, vector<1x2x32xf32>
    %217 = vector.shape_cast %216 : vector<1x2x32xf32> to vector<2x32xf32>
    %218 = arith.subf %215, %185 : vector<2x32xf32>
    %219 = arith.mulf %217, %218 : vector<2x32xf32>
    %220 = arith.addf %185, %219 : vector<2x32xf32>
    %cst_58 = arith.constant dense<0.000000e+00> : vector<2x96xf32>
    %221 = tpu.matmul %220, %1, %cst_58 {dimension_numbers = #tpu.dot_dimension_numbers<[1], [0], [0], [1], [0, 0, 1, 1], [], []>} : vector<2x32xf32>, vector<32x96xf32>, vector<2x96xf32> -> vector<2x96xf32>
    %c6 = arith.constant 6 : index
    %c0_59 = arith.constant 0 : index
    %c0_60 = arith.constant 0 : index
    %222 = vector.load %arg1[%c6, %c0_59, %c0_60] : memref<8x2x96xf32, #tpu.memory_space<vmem>>, vector<1x2x96xf32>
    %223 = vector.shape_cast %222 : vector<1x2x96xf32> to vector<2x96xf32>
    %224 = vector.extract_strided_slice %223 {offsets = [0, 0], sizes = [2, 32], strides = [1, 1]} : vector<2x96xf32> to vector<2x32xf32>
    %225 = vector.extract_strided_slice %221 {offsets = [0, 0], sizes = [2, 32], strides = [1, 1]} : vector<2x96xf32> to vector<2x32xf32>
    %226 = arith.addf %224, %225 : vector<2x32xf32>
    %227 = arith.negf %226 : vector<2x32xf32>
    %228 = math.exp %227 : vector<2x32xf32>
    %cst_61 = arith.constant 1.000000e+00 : f32
    %229 = vector.broadcast %cst_61 : f32 to vector<2x32xf32>
    %230 = arith.addf %229, %228 : vector<2x32xf32>
    %231 = arith.divf %229, %230 : vector<2x32xf32>
    %232 = vector.extract_strided_slice %223 {offsets = [0, 32], sizes = [2, 32], strides = [1, 1]} : vector<2x96xf32> to vector<2x32xf32>
    %233 = vector.extract_strided_slice %221 {offsets = [0, 32], sizes = [2, 32], strides = [1, 1]} : vector<2x96xf32> to vector<2x32xf32>
    %234 = arith.addf %232, %233 : vector<2x32xf32>
    %235 = arith.negf %234 : vector<2x32xf32>
    %236 = math.exp %235 : vector<2x32xf32>
    %cst_62 = arith.constant 1.000000e+00 : f32
    %237 = vector.broadcast %cst_62 : f32 to vector<2x32xf32>
    %238 = arith.addf %237, %236 : vector<2x32xf32>
    %239 = arith.divf %237, %238 : vector<2x32xf32>
    %240 = vector.extract_strided_slice %223 {offsets = [0, 64], sizes = [2, 32], strides = [1, 1]} : vector<2x96xf32> to vector<2x32xf32>
    %241 = vector.extract_strided_slice %221 {offsets = [0, 64], sizes = [2, 32], strides = [1, 1]} : vector<2x96xf32> to vector<2x32xf32>
    %242 = arith.addf %241, %7 : vector<2x32xf32>
    %243 = arith.mulf %231, %242 : vector<2x32xf32>
    %244 = arith.addf %240, %243 : vector<2x32xf32>
    %245 = math.tanh %244 : vector<2x32xf32>
    %cst_63 = arith.constant 1.000000e+00 : f32
    %246 = vector.broadcast %cst_63 : f32 to vector<2x32xf32>
    %247 = arith.subf %246, %239 : vector<2x32xf32>
    %248 = arith.mulf %247, %245 : vector<2x32xf32>
    %249 = arith.mulf %239, %220 : vector<2x32xf32>
    %250 = arith.addf %248, %249 : vector<2x32xf32>
    %c6_64 = arith.constant 6 : index
    %c0_65 = arith.constant 0 : index
    %c0_66 = arith.constant 0 : index
    %251 = vector.load %arg2[%c6_64, %c0_65, %c0_66] : memref<8x2x32xf32, #tpu.memory_space<vmem>>, vector<1x2x32xf32>
    %252 = vector.shape_cast %251 : vector<1x2x32xf32> to vector<2x32xf32>
    %253 = arith.subf %250, %220 : vector<2x32xf32>
    %254 = arith.mulf %252, %253 : vector<2x32xf32>
    %255 = arith.addf %220, %254 : vector<2x32xf32>
    %cst_67 = arith.constant dense<0.000000e+00> : vector<2x96xf32>
    %256 = tpu.matmul %255, %1, %cst_67 {dimension_numbers = #tpu.dot_dimension_numbers<[1], [0], [0], [1], [0, 0, 1, 1], [], []>} : vector<2x32xf32>, vector<32x96xf32>, vector<2x96xf32> -> vector<2x96xf32>
    %c7 = arith.constant 7 : index
    %c0_68 = arith.constant 0 : index
    %c0_69 = arith.constant 0 : index
    %257 = vector.load %arg1[%c7, %c0_68, %c0_69] : memref<8x2x96xf32, #tpu.memory_space<vmem>>, vector<1x2x96xf32>
    %258 = vector.shape_cast %257 : vector<1x2x96xf32> to vector<2x96xf32>
    %259 = vector.extract_strided_slice %258 {offsets = [0, 0], sizes = [2, 32], strides = [1, 1]} : vector<2x96xf32> to vector<2x32xf32>
    %260 = vector.extract_strided_slice %256 {offsets = [0, 0], sizes = [2, 32], strides = [1, 1]} : vector<2x96xf32> to vector<2x32xf32>
    %261 = arith.addf %259, %260 : vector<2x32xf32>
    %262 = arith.negf %261 : vector<2x32xf32>
    %263 = math.exp %262 : vector<2x32xf32>
    %cst_70 = arith.constant 1.000000e+00 : f32
    %264 = vector.broadcast %cst_70 : f32 to vector<2x32xf32>
    %265 = arith.addf %264, %263 : vector<2x32xf32>
    %266 = arith.divf %264, %265 : vector<2x32xf32>
    %267 = vector.extract_strided_slice %258 {offsets = [0, 32], sizes = [2, 32], strides = [1, 1]} : vector<2x96xf32> to vector<2x32xf32>
    %268 = vector.extract_strided_slice %256 {offsets = [0, 32], sizes = [2, 32], strides = [1, 1]} : vector<2x96xf32> to vector<2x32xf32>
    %269 = arith.addf %267, %268 : vector<2x32xf32>
    %270 = arith.negf %269 : vector<2x32xf32>
    %271 = math.exp %270 : vector<2x32xf32>
    %cst_71 = arith.constant 1.000000e+00 : f32
    %272 = vector.broadcast %cst_71 : f32 to vector<2x32xf32>
    %273 = arith.addf %272, %271 : vector<2x32xf32>
    %274 = arith.divf %272, %273 : vector<2x32xf32>
    %275 = vector.extract_strided_slice %258 {offsets = [0, 64], sizes = [2, 32], strides = [1, 1]} : vector<2x96xf32> to vector<2x32xf32>
    %276 = vector.extract_strided_slice %256 {offsets = [0, 64], sizes = [2, 32], strides = [1, 1]} : vector<2x96xf32> to vector<2x32xf32>
    %277 = arith.addf %276, %7 : vector<2x32xf32>
    %278 = arith.mulf %266, %277 : vector<2x32xf32>
    %279 = arith.addf %275, %278 : vector<2x32xf32>
    %280 = math.tanh %279 : vector<2x32xf32>
    %cst_72 = arith.constant 1.000000e+00 : f32
    %281 = vector.broadcast %cst_72 : f32 to vector<2x32xf32>
    %282 = arith.subf %281, %274 : vector<2x32xf32>
    %283 = arith.mulf %282, %280 : vector<2x32xf32>
    %284 = arith.mulf %274, %255 : vector<2x32xf32>
    %285 = arith.addf %283, %284 : vector<2x32xf32>
    %c7_73 = arith.constant 7 : index
    %c0_74 = arith.constant 0 : index
    %c0_75 = arith.constant 0 : index
    %286 = vector.load %arg2[%c7_73, %c0_74, %c0_75] : memref<8x2x32xf32, #tpu.memory_space<vmem>>, vector<1x2x32xf32>
    %287 = vector.shape_cast %286 : vector<1x2x32xf32> to vector<2x32xf32>
    %288 = arith.subf %285, %255 : vector<2x32xf32>
    %289 = arith.mulf %287, %288 : vector<2x32xf32>
    %290 = arith.addf %255, %289 : vector<2x32xf32>
    %cst_76 = arith.constant 0.000000e+00 : f32
    %291 = vector.broadcast %cst_76 : f32 to vector<2x32xf32>
    %292 = arith.maximumf %290, %291 : vector<2x32xf32>
    %cst_77 = arith.constant dense<0.000000e+00> : vector<2x32xf32>
    %293 = tpu.matmul %292, %2, %cst_77 {dimension_numbers = #tpu.dot_dimension_numbers<[1], [0], [0], [1], [0, 0, 1, 1], [], []>} : vector<2x32xf32>, vector<32x32xf32>, vector<2x32xf32> -> vector<2x32xf32>
    %294 = vector.broadcast %8 : vector<1x32xf32> to vector<2x32xf32>
    %295 = arith.addf %293, %294 : vector<2x32xf32>
    %cst_78 = arith.constant dense<0.000000e+00> : vector<2x128xf32>
    %296 = tpu.matmul %295, %3, %cst_78 {dimension_numbers = #tpu.dot_dimension_numbers<[1], [0], [0], [1], [0, 0, 1, 1], [], []>} : vector<2x32xf32>, vector<32x128xf32>, vector<2x128xf32> -> vector<2x128xf32>
    %297 = vector.broadcast %9 : vector<1x128xf32> to vector<2x128xf32>
    %298 = arith.addf %296, %297 : vector<2x128xf32>
    %c0_79 = arith.constant 0 : index
    %c0_80 = arith.constant 0 : index
    %299 = vector.load %arg5[%c0_79, %c0_80] : memref<2x128xf32, #tpu.memory_space<vmem>>, vector<2x128xf32>
    tpu.vector_store %arg5[%c0_79, %c0_80], %298 {strides = array<i32>} : memref<2x128xf32, #tpu.memory_space<vmem>>, vector<2x128xf32>,
    return
  }
  func.func @transform_0(%arg0: i32) -> (i32, i32, i32) {
    %c0_i32 = arith.constant 0 : i32
    %c0_i32_0 = arith.constant 0 : i32
    %c0_i32_1 = arith.constant 0 : i32
    %c0_i32_2 = arith.constant 0 : i32
    return %c0_i32, %c0_i32_0, %c0_i32_1 : i32, i32, i32
  }
  func.func @transform_1(%arg0: i32) -> (i32, i32, i32) {
    %c0_i32 = arith.constant 0 : i32
    %c0_i32_0 = arith.constant 0 : i32
    %c0_i32_1 = arith.constant 0 : i32
    %c0_i32_2 = arith.constant 0 : i32
    return %c0_i32, %c0_i32_0, %c0_i32_1 : i32, i32, i32
  }
  func.func @transform_2(%arg0: i32) -> (i32, i32) {
    %c0_i32 = arith.constant 0 : i32
    %c0_i32_0 = arith.constant 0 : i32
    %c0_i32_1 = arith.constant 0 : i32
    return %c0_i32, %c0_i32_0 : i32, i32
  }
  func.func @transform_3(%arg0: i32) -> (i32, i32) {
    %c0_i32 = arith.constant 0 : i32
    %c0_i32_0 = arith.constant 0 : i32
    %c0_i32_1 = arith.constant 0 : i32
    return %c0_i32, %c0_i32_0 : i32, i32
  }
  func.func @transform_4(%arg0: i32) -> (i32, i32) {
    %c0_i32 = arith.constant 0 : i32
    %c0_i32_0 = arith.constant 0 : i32
    %c0_i32_1 = arith.constant 0 : i32
    return %c0_i32, %c0_i32_0 : i32, i32
  }
}

</mosaic_0001>

<llo_original>
// kernel: tpu_custom_call.1
$region0: #{tpu_custom_call.1}
  #allocation0 [shape = 'u32[]', space=smem, size = 0x4, offset = 0x4, fixed_abs, tag = 'smem constant byte address 0x4 - core index']
  #allocation1 [shape = 'u32[144,128]{1,0:T(1,128)}', space=vmem, size = 0x12000, scoped, tag = 'internal scratch']
  %s0 = inlined_call_operand.hbm [shape: f32[8,2,96], index: 0, kind: input, shape index: {}]
  %s1 = inlined_call_operand.hbm [shape: f32[8,2,32], index: 1, kind: input, shape index: {}]
  %s2 = inlined_call_operand.hbm [shape: f32[32,256], index: 2, kind: input, shape index: {}]
  %s3 = inlined_call_operand.vmem [shape: f32[1,192], index: 3, kind: input, shape index: {}]
  %s4 = inlined_call_operand.hbm [shape: f32[2,128], index: 4, kind: output, shape index: {}]
  %s5 = sld [smem:[#allocation0]]
  $region38: #{tpu_custom_call.1} parent=0
    _
  %s7 = ssub.s32 1, %s5
  %s8 = scalar_select 0, %s7, %s5
  $region1: #{tpu_custom_call.1} parent=0
    #allocation2 [shape = 'u8[8192]{0}', space=vmem, size = 0x2000, scoped, tag = 'input window, operand 0, single buffered']
    #allocation3 [shape = 's32[1]{0}', space=sflag, size = 0x4, scoped, tag = 'scoped memory for tpu_custom_call.1']
    #allocation4 [shape = 's32[1]{0}', space=sflag, size = 0x4, scoped, tag = 'scoped memory for tpu_custom_call.1']
    #allocation5 [shape = 'u8[8192]{0}', space=vmem, size = 0x2000, scoped, tag = 'input window, operand 1, single buffered']
    #allocation6 [shape = 's32[1]{0}', space=sflag, size = 0x4, scoped, tag = 'scoped memory for tpu_custom_call.1']
    #allocation7 [shape = 'u8[32768]{0}', space=vmem, size = 0x8000, scoped, tag = 'input window, operand 2, single buffered']
    #allocation8 [shape = 'u8[1024]{0}', space=vmem, size = 0x400, scoped, tag = 'output window, operand 0, single buffered']
    %9 = vsyncpa [#allocation3], 0
    %10 = vsyncpa [#allocation6], 0
    %11 = vsyncpa [#allocation4], 0
    // Predicated region
    $region2: #{tpu_custom_call.1} parent=1 // pred_check
      _
    $region3: #{tpu_custom_call.1} parent=1 // pred_check_branch
      %13 = sbr.rel (0) target = $region5
    $region4: #{tpu_custom_call.1} parent=1 // pred_region
      %s15 = ssub.s32 256, 256
      %16 = vsyncadd [#allocation3], %s15
      %s17 = sshll.u32 [#allocation2], 4
      %s18 = int_to_ptr.vmem [resolvable:$true] %s17
      %23 = dma.hbm_to_vmem [thread:$0]  %s0, 256, %s18, [#allocation3], 32, 32, 2
    $region5: #{tpu_custom_call.1} parent=1 // pred_fallthru
      _
    // Predicated region
    $region6: #{tpu_custom_call.1} parent=1 // pred_check
      _
    $region7: #{tpu_custom_call.1} parent=1 // pred_check_branch
      %25 = sbr.rel (0) target = $region9
    $region8: #{tpu_custom_call.1} parent=1 // pred_region
      %s27 = ssub.s32 256, 256
      %28 = vsyncadd [#allocation6], %s27
      %s29 = sshll.u32 [#allocation5], 4
      %s30 = int_to_ptr.vmem [resolvable:$true] %s29
      %35 = dma.hbm_to_vmem [thread:$0]  %s1, 256, %s30, [#allocation6], 32, 32, 2
    $region9: #{tpu_custom_call.1} parent=1 // pred_fallthru
      _
    // Predicated region
    $region10: #{tpu_custom_call.1} parent=1 // pred_check
      _
    $region11: #{tpu_custom_call.1} parent=1 // pred_check_branch
      %37 = sbr.rel (0) target = $region13
    $region12: #{tpu_custom_call.1} parent=1 // pred_region
      %s39 = ssub.s32 1024, 1024
      %40 = vsyncadd [#allocation6], %s39
      %s41 = sshll.u32 [#allocation7], 4
      %s42 = int_to_ptr.vmem [resolvable:$true] %s41
      %47 = dma.hbm_to_vmem [thread:$0]  %s2, 1024, %s42, [#allocation6], 256, 256, 16
    $region13: #{tpu_custom_call.1} parent=1 // pred_fallthru
      _
    // Predicated region
    $region14: #{tpu_custom_call.1} parent=1 // pred_check
      _
    $region15: #{tpu_custom_call.1} parent=1 // pred_check_branch
      %49 = sbr.rel (0) target = $region17
    $region16: #{tpu_custom_call.1} parent=1 // pred_region
      _
    $region17: #{tpu_custom_call.1} parent=1 // pred_fallthru
      _
    // Predicated region
    $region18: #{tpu_custom_call.1} parent=1 // pred_check
      _
    $region19: #{tpu_custom_call.1} parent=1 // pred_check_branch
      %51 = sbr.rel (0) target = $region21
    $region20: #{tpu_custom_call.1} parent=1 // pred_region
      %52 = dma.done [#allocation3], 256
    $region21: #{tpu_custom_call.1} parent=1 // pred_fallthru
      _
    // Predicated region
    $region22: #{tpu_custom_call.1} parent=1 // pred_check
      _
    $region23: #{tpu_custom_call.1} parent=1 // pred_check_branch
      %54 = sbr.rel (0) target = $region25
    $region24: #{tpu_custom_call.1} parent=1 // pred_region
      %55 = dma.done [#allocation6], 256
    $region25: #{tpu_custom_call.1} parent=1 // pred_fallthru
      _
    // Predicated region
    $region26: #{tpu_custom_call.1} parent=1 // pred_check
      _
    $region27: #{tpu_custom_call.1} parent=1 // pred_check_branch
      %57 = sbr.rel (0) target = $region29
    $region28: #{tpu_custom_call.1} parent=1 // pred_region
      %58 = dma.done [#allocation6], 1024
    $region29: #{tpu_custom_call.1} parent=1 // pred_fallthru
      _
    %v59 = vld [vmem:[#allocation7] sm:$0xff]
    %v60 = vld [vmem:[#allocation7 + $0x8] sm:$0xff]
    %v61 = vld [vmem:[#allocation7 + $0x10] sm:$0xff]
    %v62 = vld [vmem:[#allocation7 + $0x18] sm:$0xff]
    %v63 = vld [vmem:[#allocation7 + $0x20] sm:$0xff]
    %v64 = vld [vmem:[#allocation7 + $0x28] sm:$0xff]
    %v65 = vld [vmem:[#allocation7 + $0x30] sm:$0xff]
    %v66 = vld [vmem:[#allocation7 + $0x38] sm:$0xff]
    %v67 = vld [vmem:[%s3] sm:$0x3]
    %v69 = vlaneseq
    %v70 = vshrl.u32 %v69, 7
    %v71 = vsub.s32 0, %v70
    %v72 = vrot.slane %v67, %v71
    %vm73 = vcmask 261120
    %v75 = vsel %vm73, 0.0, 0
    %77 = vmatprep.subr.mxu0 0.0
    %78 = vmatpush1.msra.mxu0 %v59
    %79 = vmatprep.subr.mxu0 0.0
    %80 = vmatpush1.msra.mxu0 %v61
    %81 = vmatprep.subr.mxu0 0.0
    %82 = vmatpush1.msra.mxu0 %v63
    %83 = vmatprep.subr.mxu0 0.0
    %84 = vmatpush1.msra.mxu0 %v65
    %85 = vmatprep.subr.mxu0 0.0
    %86 = vmatpush1.msra.mxu0 0.0
    %87 = vmatprep.subr.mxu0 0.0
    %88 = vmatpush1.msra.mxu0 0.0
    %89 = vmatprep.subr.mxu0 0.0
    %90 = vmatpush1.msra.mxu0 0.0
    %91 = vmatprep.subr.mxu0 0.0
    %92 = vmatpush1.msra.mxu0 0.0
    %93 = vmatprep.subr.mxu0 0.0
    %94 = vmatpush1.msra.mxu0 0.0
    %95 = vmatprep.subr.mxu0 0.0
    %96 = vmatpush1.msra.mxu0 0.0
    %97 = vmatprep.subr.mxu0 0.0
    %98 = vmatpush1.msra.mxu0 0.0
    %99 = vmatprep.subr.mxu0 0.0
    %100 = vmatpush1.msra.mxu0 0.0
    %101 = vmatprep.subr.mxu0 0.0
    %102 = vmatpush1.msra.mxu0 0.0
    %103 = vmatprep.subr.mxu0 0.0
    %104 = vmatpush1.msra.mxu0 0.0
    %105 = vmatprep.subr.mxu0 0.0
    %106 = vmatpush1.msra.mxu0 0.0
    %107 = vmatprep.subr.mxu0 0.0
    %108 = vmatpush1.msra.mxu0 0.0
    %109 = vmatprep.subr.mxu0 0.0
    %110 = vmatpush1.msra.mxu0 0.0
    %111 = vmatprep.subr.mxu0 0.0
    %112 = vmatpush1.msra.mxu0 0.0
    %113 = vmatprep.subr.mxu0 0.0
    %114 = vmatpush1.msra.mxu0 0.0
    %115 = vmatprep.subr.mxu0 0.0
    %116 = vmatpush1.msra.mxu0 0.0
    %117 = vmatprep.subr.mxu0 0.0
    %118 = vmatpush1.msra.mxu0 0.0
    %119 = vmatprep.subr.mxu0 0.0
    %120 = vmatpush1.msra.mxu0 0.0
    %121 = vmatprep.subr.mxu0 0.0
    %122 = vmatpush1.msra.mxu0 0.0
    %123 = vmatprep.subr.mxu0 0.0
    %124 = vmatpush1.msra.mxu0 0.0
    %125 = vmatprep.subr.mxu0 0.0
    %126 = vmatpush1.msra.mxu0 0.0
    %127 = vmatprep.subr.mxu0 0.0
    %128 = vmatpush1.msra.mxu0 0.0
    %129 = vmatprep.subr.mxu0 0.0
    %130 = vmatpush1.msra.mxu0 0.0
    %131 = vmatprep.subr.mxu0 0.0
    %132 = vmatpush1.msra.mxu0 0.0
    %133 = vmatprep.subr.mxu0 0.0
    %134 = vmatpush1.msra.mxu0 0.0
    %135 = vmatprep.subr.mxu0 0.0
    %136 = vmatpush1.msra.mxu0 0.0
    %137 = vmatprep.subr.mxu0 0.0
    %138 = vmatpush1.msra.mxu0 0.0
    %139 = vmatprep.subr.mxu0 0.0
    %140 = vmatpush1.msra.mxu0 0.0
    %141 = vmatprep.mubr.f32.mxu0 0.0
    %142 = vmatmul.mubr.f32.gmra.mrb[0].mxu0 %v75
    %v143 = vpop.f32.mrb[0].mxu0
    %v144 = vadd.f32 0.0, %v143
    %v145 = vpop.f32.mrb[0].mxu0
    %146 = vdwg.mxu0
    %v147 = vld [vmem:[#allocation2] sm:$0x3]
    %v148 = vadd.f32 %v147, %v144
    %v149 = vxor.u32 %v148, 2147483648
    %v150 = vmul.f32 %v149, 1.442695
    %v151 = vpow.pop %v150
    %v152 = vadd.f32 %v151, 1.0
    %v153 = vrcp.pop %v152
    %v154 = vmul.f32 1.0, %v153
    %155 = vrot.lane.b32.xlu0 %v72, 64
    %v156 = vpop.permute.xlu0 %155
    %v158 = vadd.f32 %v144, %v156
    %160 = vrot.lane.b32.xlu0 %v158, 64
    %v161 = vpop.permute.xlu0 %160
    %v163 = vmul.f32 %v154, %v161
    %165 = vrot.lane.b32.xlu0 %v163, 64
    %v166 = vpop.permute.xlu0 %165
    %v168 = vadd.f32 %v147, %v166
    %v169 = vtanh.pop %v168
    %v170 = vsub.f32 1.0, %v154
    %172 = vrot.lane.b32.xlu0 %v169, 96
    %v173 = vpop.permute.xlu0 %172
    %v175 = vmul.f32 %v170, %v173
    %v176 = vmul.f32 %v154, 0.0
    %v177 = vadd.f32 %v175, %v176
    %v178 = vld [vmem:[#allocation5] sm:$0x3]
    %180 = vrot.lane.b32.xlu0 %v177, 96
    %v181 = vpop.permute.xlu0 %180
    %v183 = vmul.f32 %v178, %v181
    %v184 = vadd.f32 %v183, 0.0
    %v186 = vsel %vm73, %v184, 0
    %188 = vmatprep.subr.mxu0 0.0
    %189 = vmatpush1.msra.mxu0 %v59
    %190 = vmatprep.subr.mxu0 0.0
    %191 = vmatpush1.msra.mxu0 %v61
    %192 = vmatprep.subr.mxu0 0.0
    %193 = vmatpush1.msra.mxu0 %v63
    %194 = vmatprep.subr.mxu0 0.0
    %195 = vmatpush1.msra.mxu0 %v65
    %196 = vmatprep.subr.mxu0 0.0
    %197 = vmatpush1.msra.mxu0 0.0
    %198 = vmatprep.subr.mxu0 0.0
    %199 = vmatpush1.msra.mxu0 0.0
    %200 = vmatprep.subr.mxu0 0.0
    %201 = vmatpush1.msra.mxu0 0.0
    %202 = vmatprep.subr.mxu0 0.0
    %203 = vmatpush1.msra.mxu0 0.0
    %204 = vmatprep.subr.mxu0 0.0
    %205 = vmatpush1.msra.mxu0 0.0
    %206 = vmatprep.subr.mxu0 0.0
    %207 = vmatpush1.msra.mxu0 0.0
    %208 = vmatprep.subr.mxu0 0.0
    %209 = vmatpush1.msra.mxu0 0.0
    %210 = vmatprep.subr.mxu0 0.0
    %211 = vmatpush1.msra.mxu0 0.0
    %212 = vmatprep.subr.mxu0 0.0
    %213 = vmatpush1.msra.mxu0 0.0
    %214 = vmatprep.subr.mxu0 0.0
    %215 = vmatpush1.msra.mxu0 0.0
    %216 = vmatprep.subr.mxu0 0.0
    %217 = vmatpush1.msra.mxu0 0.0
    %218 = vmatprep.subr.mxu0 0.0
    %219 = vmatpush1.msra.mxu0 0.0
    %220 = vmatprep.subr.mxu0 0.0
    %221 = vmatpush1.msra.mxu0 0.0
    %222 = vmatprep.subr.mxu0 0.0
    %223 = vmatpush1.msra.mxu0 0.0
    %224 = vmatprep.subr.mxu0 0.0
    %225 = vmatpush1.msra.mxu0 0.0
    %226 = vmatprep.subr.mxu0 0.0
    %227 = vmatpush1.msra.mxu0 0.0
    %228 = vmatprep.subr.mxu0 0.0
    %229 = vmatpush1.msra.mxu0 0.0
    %230 = vmatprep.subr.mxu0 0.0
    %231 = vmatpush1.msra.mxu0 0.0
    %232 = vmatprep.subr.mxu0 0.0
    %233 = vmatpush1.msra.mxu0 0.0
    %234 = vmatprep.subr.mxu0 0.0
    %235 = vmatpush1.msra.mxu0 0.0
    %236 = vmatprep.subr.mxu0 0.0
    %237 = vmatpush1.msra.mxu0 0.0
    %238 = vmatprep.subr.mxu0 0.0
    %239 = vmatpush1.msra.mxu0 0.0
    %240 = vmatprep.subr.mxu0 0.0
    %241 = vmatpush1.msra.mxu0 0.0
    %242 = vmatprep.subr.mxu0 0.0
    %243 = vmatpush1.msra.mxu0 0.0
    %244 = vmatprep.subr.mxu0 0.0
    %245 = vmatpush1.msra.mxu0 0.0
    %246 = vmatprep.subr.mxu0 0.0
    %247 = vmatpush1.msra.mxu0 0.0
    %248 = vmatprep.subr.mxu0 0.0
    %249 = vmatpush1.msra.mxu0 0.0
    %250 = vmatprep.subr.mxu0 0.0
    %251 = vmatpush1.msra.mxu0 0.0
    %252 = vmatprep.mubr.f32.mxu0 0.0
    %253 = vmatmul.mubr.f32.gmra.mrb[0].mxu0 %v186
    %v254 = vpop.f32.mrb[0].mxu0
    %v255 = vadd.f32 0.0, %v254
    %v256 = vpop.f32.mrb[0].mxu0
    %257 = vdwg.mxu0
    %s258 = scalar_lea.vmem [#allocation2], 2
    %v259 = vld [vmem:[%s258] sm:$0x3]
    %v260 = vadd.f32 %v259, %v255
    %v261 = vxor.u32 %v260, 2147483648
    %v262 = vmul.f32 %v261, 1.442695
    %v263 = vpow.pop %v262
    %v264 = vadd.f32 %v263, 1.0
    %v265 = vrcp.pop %v264
    %v266 = vmul.f32 1.0, %v265
    %v267 = vadd.f32 %v255, %v156
    %269 = vrot.lane.b32.xlu0 %v267, 64
    %v270 = vpop.permute.xlu0 %269
    %v272 = vmul.f32 %v266, %v270
    %274 = vrot.lane.b32.xlu0 %v272, 64
    %v275 = vpop.permute.xlu0 %274
    %v277 = vadd.f32 %v259, %v275
    %v278 = vtanh.pop %v277
    %v279 = vsub.f32 1.0, %v266
    %281 = vrot.lane.b32.xlu0 %v278, 96
    %v282 = vpop.permute.xlu0 %281
    %v284 = vmul.f32 %v279, %v282
    %285 = vrot.lane.b32.xlu0 %v184, 32
    %v286 = vpop.permute.xlu0 %285
    %v288 = vmul.f32 %v266, %v286
    %v289 = vadd.f32 %v284, %v288
    %s290 = scalar_lea.vmem [#allocation5], 2
    %v291 = vld [vmem:[%s290] sm:$0x3]
    %v292 = vsub.f32 %v289, %v286
    %294 = vrot.lane.b32.xlu0 %v292, 96
    %v295 = vpop.permute.xlu0 %294
    %v297 = vmul.f32 %v291, %v295
    %v298 = vadd.f32 %v184, %v297
    %v300 = vsel %vm73, %v298, 0
    %302 = vmatprep.subr.mxu0 0.0
    %303 = vmatpush1.msra.mxu0 %v59
    %304 = vmatprep.subr.mxu0 0.0
    %305 = vmatpush1.msra.mxu0 %v61
    %306 = vmatprep.subr.mxu0 0.0
    %307 = vmatpush1.msra.mxu0 %v63
    %308 = vmatprep.subr.mxu0 0.0
    %309 = vmatpush1.msra.mxu0 %v65
    %310 = vmatprep.subr.mxu0 0.0
    %311 = vmatpush1.msra.mxu0 0.0
    %312 = vmatprep.subr.mxu0 0.0
    %313 = vmatpush1.msra.mxu0 0.0
    %314 = vmatprep.subr.mxu0 0.0
    %315 = vmatpush1.msra.mxu0 0.0
    %316 = vmatprep.subr.mxu0 0.0
    %317 = vmatpush1.msra.mxu0 0.0
    %318 = vmatprep.subr.mxu0 0.0
    %319 = vmatpush1.msra.mxu0 0.0
    %320 = vmatprep.subr.mxu0 0.0
    %321 = vmatpush1.msra.mxu0 0.0
    %322 = vmatprep.subr.mxu0 0.0
    %323 = vmatpush1.msra.mxu0 0.0
    %324 = vmatprep.subr.mxu0 0.0
    %325 = vmatpush1.msra.mxu0 0.0
    %326 = vmatprep.subr.mxu0 0.0
    %327 = vmatpush1.msra.mxu0 0.0
    %328 = vmatprep.subr.mxu0 0.0
    %329 = vmatpush1.msra.mxu0 0.0
    %330 = vmatprep.subr.mxu0 0.0
    %331 = vmatpush1.msra.mxu0 0.0
    %332 = vmatprep.subr.mxu0 0.0
    %333 = vmatpush1.msra.mxu0 0.0
    %334 = vmatprep.subr.mxu0 0.0
    %335 = vmatpush1.msra.mxu0 0.0
    %336 = vmatprep.subr.mxu0 0.0
    %337 = vmatpush1.msra.mxu0 0.0
    %338 = vmatprep.subr.mxu0 0.0
    %339 = vmatpush1.msra.mxu0 0.0
    %340 = vmatprep.subr.mxu0 0.0
    %341 = vmatpush1.msra.mxu0 0.0
    %342 = vmatprep.subr.mxu0 0.0
    %343 = vmatpush1.msra.mxu0 0.0
    %344 = vmatprep.subr.mxu0 0.0
    %345 = vmatpush1.msra.mxu0 0.0
    %346 = vmatprep.subr.mxu0 0.0
    %347 = vmatpush1.msra.mxu0 0.0
    %348 = vmatprep.subr.mxu0 0.0
    %349 = vmatpush1.msra.mxu0 0.0
    %350 = vmatprep.subr.mxu0 0.0
    %351 = vmatpush1.msra.mxu0 0.0
    %352 = vmatprep.subr.mxu0 0.0
    %353 = vmatpush1.msra.mxu0 0.0
    %354 = vmatprep.subr.mxu0 0.0
    %355 = vmatpush1.msra.mxu0 0.0
    %356 = vmatprep.subr.mxu0 0.0
    %357 = vmatpush1.msra.mxu0 0.0
    %358 = vmatprep.subr.mxu0 0.0
    %359 = vmatpush1.msra.mxu0 0.0
    %360 = vmatprep.subr.mxu0 0.0
    %361 = vmatpush1.msra.mxu0 0.0
    %362 = vmatprep.subr.mxu0 0.0
    %363 = vmatpush1.msra.mxu0 0.0
    %364 = vmatprep.subr.mxu0 0.0
    %365 = vmatpush1.msra.mxu0 0.0
    %366 = vmatprep.mubr.f32.mxu0 0.0
    %367 = vmatmul.mubr.f32.gmra.mrb[0].mxu0 %v300
    %v368 = vpop.f32.mrb[0].mxu0
    %v369 = vadd.f32 0.0, %v368
    %v370 = vpop.f32.mrb[0].mxu0
    %371 = vdwg.mxu0
    %s372 = scalar_lea.vmem [#allocation2], 4
    %v373 = vld [vmem:[%s372] sm:$0x3]
    %v374 = vadd.f32 %v373, %v369
    %v375 = vxor.u32 %v374, 2147483648
    %v376 = vmul.f32 %v375, 1.442695
    %v377 = vpow.pop %v376
    %v378 = vadd.f32 %v377, 1.0
    %v379 = vrcp.pop %v378
    %v380 = vmul.f32 1.0, %v379
    %v381 = vadd.f32 %v369, %v156
    %383 = vrot.lane.b32.xlu0 %v381, 64
    %v384 = vpop.permute.xlu0 %383
    %v386 = vmul.f32 %v380, %v384
    %388 = vrot.lane.b32.xlu0 %v386, 64
    %v389 = vpop.permute.xlu0 %388
    %v391 = vadd.f32 %v373, %v389
    %v392 = vtanh.pop %v391
    %v393 = vsub.f32 1.0, %v380
    %395 = vrot.lane.b32.xlu0 %v392, 96
    %v396 = vpop.permute.xlu0 %395
    %v398 = vmul.f32 %v393, %v396
    %399 = vrot.lane.b32.xlu0 %v298, 32
    %v400 = vpop.permute.xlu0 %399
    %v402 = vmul.f32 %v380, %v400
    %v403 = vadd.f32 %v398, %v402
    %s404 = scalar_lea.vmem [#allocation5], 4
    %v405 = vld [vmem:[%s404] sm:$0x3]
    %v406 = vsub.f32 %v403, %v400
    %408 = vrot.lane.b32.xlu0 %v406, 96
    %v409 = vpop.permute.xlu0 %408
    %v411 = vmul.f32 %v405, %v409
    %v412 = vadd.f32 %v298, %v411
    %v414 = vsel %vm73, %v412, 0
    %416 = vmatprep.subr.mxu0 0.0
    %417 = vmatpush1.msra.mxu0 %v59
    %418 = vmatprep.subr.mxu0 0.0
    %419 = vmatpush1.msra.mxu0 %v61
    %420 = vmatprep.subr.mxu0 0.0
    %421 = vmatpush1.msra.mxu0 %v63
    %422 = vmatprep.subr.mxu0 0.0
    %423 = vmatpush1.msra.mxu0 %v65
    %424 = vmatprep.subr.mxu0 0.0
    %425 = vmatpush1.msra.mxu0 0.0
    %426 = vmatprep.subr.mxu0 0.0
    %427 = vmatpush1.msra.mxu0 0.0
    %428 = vmatprep.subr.mxu0 0.0
    %429 = vmatpush1.msra.mxu0 0.0
    %430 = vmatprep.subr.mxu0 0.0
    %431 = vmatpush1.msra.mxu0 0.0
    %432 = vmatprep.subr.mxu0 0.0
    %433 = vmatpush1.msra.mxu0 0.0
    %434 = vmatprep.subr.mxu0 0.0
    %435 = vmatpush1.msra.mxu0 0.0
    %436 = vmatprep.subr.mxu0 0.0
    %437 = vmatpush1.msra.mxu0 0.0
    %438 = vmatprep.subr.mxu0 0.0
    %439 = vmatpush1.msra.mxu0 0.0
    %440 = vmatprep.subr.mxu0 0.0
    %441 = vmatpush1.msra.mxu0 0.0
    %442 = vmatprep.subr.mxu0 0.0
    %443 = vmatpush1.msra.mxu0 0.0
    %444 = vmatprep.subr.mxu0 0.0
    %445 = vmatpush1.msra.mxu0 0.0
    %446 = vmatprep.subr.mxu0 0.0
    %447 = vmatpush1.msra.mxu0 0.0
    %448 = vmatprep.subr.mxu0 0.0
    %449 = vmatpush1.msra.mxu0 0.0
    %450 = vmatprep.subr.mxu0 0.0
    %451 = vmatpush1.msra.mxu0 0.0
    %452 = vmatprep.subr.mxu0 0.0
    %453 = vmatpush1.msra.mxu0 0.0
    %454 = vmatprep.subr.mxu0 0.0
    %455 = vmatpush1.msra.mxu0 0.0
    %456 = vmatprep.subr.mxu0 0.0
    %457 = vmatpush1.msra.mxu0 0.0
    %458 = vmatprep.subr.mxu0 0.0
    %459 = vmatpush1.msra.mxu0 0.0
    %460 = vmatprep.subr.mxu0 0.0
    %461 = vmatpush1.msra.mxu0 0.0
    %462 = vmatprep.subr.mxu0 0.0
    %463 = vmatpush1.msra.mxu0 0.0
    %464 = vmatprep.subr.mxu0 0.0
    %465 = vmatpush1.msra.mxu0 0.0
    %466 = vmatprep.subr.mxu0 0.0
    %467 = vmatpush1.msra.mxu0 0.0
    %468 = vmatprep.subr.mxu0 0.0
    %469 = vmatpush1.msra.mxu0 0.0
    %470 = vmatprep.subr.mxu0 0.0
    %471 = vmatpush1.msra.mxu0 0.0
    %472 = vmatprep.subr.mxu0 0.0
    %473 = vmatpush1.msra.mxu0 0.0
    %474 = vmatprep.subr.mxu0 0.0
    %475 = vmatpush1.msra.mxu0 0.0
    %476 = vmatprep.subr.mxu0 0.0
    %477 = vmatpush1.msra.mxu0 0.0
    %478 = vmatprep.subr.mxu0 0.0
    %479 = vmatpush1.msra.mxu0 0.0
    %480 = vmatprep.mubr.f32.mxu0 0.0
    %481 = vmatmul.mubr.f32.gmra.mrb[0].mxu0 %v414
    %v482 = vpop.f32.mrb[0].mxu0
    %v483 = vadd.f32 0.0, %v482
    %v484 = vpop.f32.mrb[0].mxu0
    %485 = vdwg.mxu0
    %s486 = scalar_lea.vmem [#allocation2], 6
    %v487 = vld [vmem:[%s486] sm:$0x3]
    %v488 = vadd.f32 %v487, %v483
    %v489 = vxor.u32 %v488, 2147483648
    %v490 = vmul.f32 %v489, 1.442695
    %v491 = vpow.pop %v490
    %v492 = vadd.f32 %v491, 1.0
    %v493 = vrcp.pop %v492
    %v494 = vmul.f32 1.0, %v493
    %v495 = vadd.f32 %v483, %v156
    %497 = vrot.lane.b32.xlu0 %v495, 64
    %v498 = vpop.permute.xlu0 %497
    %v500 = vmul.f32 %v494, %v498
    %502 = vrot.lane.b32.xlu0 %v500, 64
    %v503 = vpop.permute.xlu0 %502
    %v505 = vadd.f32 %v487, %v503
    %v506 = vtanh.pop %v505
    %v507 = vsub.f32 1.0, %v494
    %509 = vrot.lane.b32.xlu0 %v506, 96
    %v510 = vpop.permute.xlu0 %509
    %v512 = vmul.f32 %v507, %v510
    %513 = vrot.lane.b32.xlu0 %v412, 32
    %v514 = vpop.permute.xlu0 %513
    %v516 = vmul.f32 %v494, %v514
    %v517 = vadd.f32 %v512, %v516
    %s518 = scalar_lea.vmem [#allocation5], 6
    %v519 = vld [vmem:[%s518] sm:$0x3]
    %v520 = vsub.f32 %v517, %v514
    %522 = vrot.lane.b32.xlu0 %v520, 96
    %v523 = vpop.permute.xlu0 %522
    %v525 = vmul.f32 %v519, %v523
    %v526 = vadd.f32 %v412, %v525
    %v528 = vsel %vm73, %v526, 0
    %530 = vmatprep.subr.mxu0 0.0
    %531 = vmatpush1.msra.mxu0 %v59
    %532 = vmatprep.subr.mxu0 0.0
    %533 = vmatpush1.msra.mxu0 %v61
    %534 = vmatprep.subr.mxu0 0.0
    %535 = vmatpush1.msra.mxu0 %v63
    %536 = vmatprep.subr.mxu0 0.0
    %537 = vmatpush1.msra.mxu0 %v65
    %538 = vmatprep.subr.mxu0 0.0
    %539 = vmatpush1.msra.mxu0 0.0
    %540 = vmatprep.subr.mxu0 0.0
    %541 = vmatpush1.msra.mxu0 0.0
    %542 = vmatprep.subr.mxu0 0.0
    %543 = vmatpush1.msra.mxu0 0.0
    %544 = vmatprep.subr.mxu0 0.0
    %545 = vmatpush1.msra.mxu0 0.0
    %546 = vmatprep.subr.mxu0 0.0
    %547 = vmatpush1.msra.mxu0 0.0
    %548 = vmatprep.subr.mxu0 0.0
    %549 = vmatpush1.msra.mxu0 0.0
    %550 = vmatprep.subr.mxu0 0.0
    %551 = vmatpush1.msra.mxu0 0.0
    %552 = vmatprep.subr.mxu0 0.0
    %553 = vmatpush1.msra.mxu0 0.0
    %554 = vmatprep.subr.mxu0 0.0
    %555 = vmatpush1.msra.mxu0 0.0
    %556 = vmatprep.subr.mxu0 0.0
    %557 = vmatpush1.msra.mxu0 0.0
    %558 = vmatprep.subr.mxu0 0.0
    %559 = vmatpush1.msra.mxu0 0.0
    %560 = vmatprep.subr.mxu0 0.0
    %561 = vmatpush1.msra.mxu0 0.0
    %562 = vmatprep.subr.mxu0 0.0
    %563 = vmatpush1.msra.mxu0 0.0
    %564 = vmatprep.subr.mxu0 0.0
    %565 = vmatpush1.msra.mxu0 0.0
    %566 = vmatprep.subr.mxu0 0.0
    %567 = vmatpush1.msra.mxu0 0.0
    %568 = vmatprep.subr.mxu0 0.0
    %569 = vmatpush1.msra.mxu0 0.0
    %570 = vmatprep.subr.mxu0 0.0
    %571 = vmatpush1.msra.mxu0 0.0
    %572 = vmatprep.subr.mxu0 0.0
    %573 = vmatpush1.msra.mxu0 0.0
    %574 = vmatprep.subr.mxu0 0.0
    %575 = vmatpush1.msra.mxu0 0.0
    %576 = vmatprep.subr.mxu0 0.0
    %577 = vmatpush1.msra.mxu0 0.0
    %578 = vmatprep.subr.mxu0 0.0
    %579 = vmatpush1.msra.mxu0 0.0
    %580 = vmatprep.subr.mxu0 0.0
    %581 = vmatpush1.msra.mxu0 0.0
    %582 = vmatprep.subr.mxu0 0.0
    %583 = vmatpush1.msra.mxu0 0.0
    %584 = vmatprep.subr.mxu0 0.0
    %585 = vmatpush1.msra.mxu0 0.0
    %586 = vmatprep.subr.mxu0 0.0
    %587 = vmatpush1.msra.mxu0 0.0
    %588 = vmatprep.subr.mxu0 0.0
    %589 = vmatpush1.msra.mxu0 0.0
    %590 = vmatprep.subr.mxu0 0.0
    %591 = vmatpush1.msra.mxu0 0.0
    %592 = vmatprep.subr.mxu0 0.0
    %593 = vmatpush1.msra.mxu0 0.0
    %594 = vmatprep.mubr.f32.mxu0 0.0
    %595 = vmatmul.mubr.f32.gmra.mrb[0].mxu0 %v528
    %v596 = vpop.f32.mrb[0].mxu0
    %v597 = vadd.f32 0.0, %v596
    %v598 = vpop.f32.mrb[0].mxu0
    %599 = vdwg.mxu0
    %s600 = scalar_lea.vmem [#allocation2], 8
    %v601 = vld [vmem:[%s600] sm:$0x3]
    %v602 = vadd.f32 %v601, %v597
    %v603 = vxor.u32 %v602, 2147483648
    %v604 = vmul.f32 %v603, 1.442695
    %v605 = vpow.pop %v604
    %v606 = vadd.f32 %v605, 1.0
    %v607 = vrcp.pop %v606
    %v608 = vmul.f32 1.0, %v607
    %v609 = vadd.f32 %v597, %v156
    %611 = vrot.lane.b32.xlu0 %v609, 64
    %v612 = vpop.permute.xlu0 %611
    %v614 = vmul.f32 %v608, %v612
    %616 = vrot.lane.b32.xlu0 %v614, 64
    %v617 = vpop.permute.xlu0 %616
    %v619 = vadd.f32 %v601, %v617
    %v620 = vtanh.pop %v619
    %v621 = vsub.f32 1.0, %v608
    %623 = vrot.lane.b32.xlu0 %v620, 96
    %v624 = vpop.permute.xlu0 %623
    %v626 = vmul.f32 %v621, %v624
    %627 = vrot.lane.b32.xlu0 %v526, 32
    %v628 = vpop.permute.xlu0 %627
    %v630 = vmul.f32 %v608, %v628
    %v631 = vadd.f32 %v626, %v630
    %s632 = scalar_lea.vmem [#allocation5], 8
    %v633 = vld [vmem:[%s632] sm:$0x3]
    %v634 = vsub.f32 %v631, %v628
    %636 = vrot.lane.b32.xlu0 %v634, 96
    %v637 = vpop.permute.xlu0 %636
    %v639 = vmul.f32 %v633, %v637
    %v640 = vadd.f32 %v526, %v639
    %v642 = vsel %vm73, %v640, 0
    %644 = vmatprep.subr.mxu0 0.0
    %645 = vmatpush1.msra.mxu0 %v59
    %646 = vmatprep.subr.mxu0 0.0
    %647 = vmatpush1.msra.mxu0 %v61
    %648 = vmatprep.subr.mxu0 0.0
    %649 = vmatpush1.msra.mxu0 %v63
    %650 = vmatprep.subr.mxu0 0.0
    %651 = vmatpush1.msra.mxu0 %v65
    %652 = vmatprep.subr.mxu0 0.0
    %653 = vmatpush1.msra.mxu0 0.0
    %654 = vmatprep.subr.mxu0 0.0
    %655 = vmatpush1.msra.mxu0 0.0
    %656 = vmatprep.subr.mxu0 0.0
    %657 = vmatpush1.msra.mxu0 0.0
    %658 = vmatprep.subr.mxu0 0.0
    %659 = vmatpush1.msra.mxu0 0.0
    %660 = vmatprep.subr.mxu0 0.0
    %661 = vmatpush1.msra.mxu0 0.0
    %662 = vmatprep.subr.mxu0 0.0
    %663 = vmatpush1.msra.mxu0 0.0
    %664 = vmatprep.subr.mxu0 0.0
    %665 = vmatpush1.msra.mxu0 0.0
    %666 = vmatprep.subr.mxu0 0.0
    %667 = vmatpush1.msra.mxu0 0.0
    %668 = vmatprep.subr.mxu0 0.0
    %669 = vmatpush1.msra.mxu0 0.0
    %670 = vmatprep.subr.mxu0 0.0
    %671 = vmatpush1.msra.mxu0 0.0
    %672 = vmatprep.subr.mxu0 0.0
    %673 = vmatpush1.msra.mxu0 0.0
    %674 = vmatprep.subr.mxu0 0.0
    %675 = vmatpush1.msra.mxu0 0.0
    %676 = vmatprep.subr.mxu0 0.0
    %677 = vmatpush1.msra.mxu0 0.0
    %678 = vmatprep.subr.mxu0 0.0
    %679 = vmatpush1.msra.mxu0 0.0
    %680 = vmatprep.subr.mxu0 0.0
    %681 = vmatpush1.msra.mxu0 0.0
    %682 = vmatprep.subr.mxu0 0.0
    %683 = vmatpush1.msra.mxu0 0.0
    %684 = vmatprep.subr.mxu0 0.0
    %685 = vmatpush1.msra.mxu0 0.0
    %686 = vmatprep.subr.mxu0 0.0
    %687 = vmatpush1.msra.mxu0 0.0
    %688 = vmatprep.subr.mxu0 0.0
    %689 = vmatpush1.msra.mxu0 0.0
    %690 = vmatprep.subr.mxu0 0.0
    %691 = vmatpush1.msra.mxu0 0.0
    %692 = vmatprep.subr.mxu0 0.0
    %693 = vmatpush1.msra.mxu0 0.0
    %694 = vmatprep.subr.mxu0 0.0
    %695 = vmatpush1.msra.mxu0 0.0
    %696 = vmatprep.subr.mxu0 0.0
    %697 = vmatpush1.msra.mxu0 0.0
    %698 = vmatprep.subr.mxu0 0.0
    %699 = vmatpush1.msra.mxu0 0.0
    %700 = vmatprep.subr.mxu0 0.0
    %701 = vmatpush1.msra.mxu0 0.0
    %702 = vmatprep.subr.mxu0 0.0
    %703 = vmatpush1.msra.mxu0 0.0
    %704 = vmatprep.subr.mxu0 0.0
    %705 = vmatpush1.msra.mxu0 0.0
    %706 = vmatprep.subr.mxu0 0.0
    %707 = vmatpush1.msra.mxu0 0.0
    %708 = vmatprep.mubr.f32.mxu0 0.0
    %709 = vmatmul.mubr.f32.gmra.mrb[0].mxu0 %v642
    %v710 = vpop.f32.mrb[0].mxu0
    %v711 = vadd.f32 0.0, %v710
    %v712 = vpop.f32.mrb[0].mxu0
    %713 = vdwg.mxu0
    %s714 = scalar_lea.vmem [#allocation2], 10
    %v715 = vld [vmem:[%s714] sm:$0x3]
    %v716 = vadd.f32 %v715, %v711
    %v717 = vxor.u32 %v716, 2147483648
    %v718 = vmul.f32 %v717, 1.442695
    %v719 = vpow.pop %v718
    %v720 = vadd.f32 %v719, 1.0
    %v721 = vrcp.pop %v720
    %v722 = vmul.f32 1.0, %v721
    %v723 = vadd.f32 %v711, %v156
    %725 = vrot.lane.b32.xlu0 %v723, 64
    %v726 = vpop.permute.xlu0 %725
    %v728 = vmul.f32 %v722, %v726
    %730 = vrot.lane.b32.xlu0 %v728, 64
    %v731 = vpop.permute.xlu0 %730
    %v733 = vadd.f32 %v715, %v731
    %v734 = vtanh.pop %v733
    %v735 = vsub.f32 1.0, %v722
    %737 = vrot.lane.b32.xlu0 %v734, 96
    %v738 = vpop.permute.xlu0 %737
    %v740 = vmul.f32 %v735, %v738
    %741 = vrot.lane.b32.xlu0 %v640, 32
    %v742 = vpop.permute.xlu0 %741
    %v744 = vmul.f32 %v722, %v742
    %v745 = vadd.f32 %v740, %v744
    %s746 = scalar_lea.vmem [#allocation5], 10
    %v747 = vld [vmem:[%s746] sm:$0x3]
    %v748 = vsub.f32 %v745, %v742
    %750 = vrot.lane.b32.xlu0 %v748, 96
    %v751 = vpop.permute.xlu0 %750
    %v753 = vmul.f32 %v747, %v751
    %v754 = vadd.f32 %v640, %v753
    %v756 = vsel %vm73, %v754, 0
    %758 = vmatprep.subr.mxu0 0.0
    %759 = vmatpush1.msra.mxu0 %v59
    %760 = vmatprep.subr.mxu0 0.0
    %761 = vmatpush1.msra.mxu0 %v61
    %762 = vmatprep.subr.mxu0 0.0
    %763 = vmatpush1.msra.mxu0 %v63
    %764 = vmatprep.subr.mxu0 0.0
    %765 = vmatpush1.msra.mxu0 %v65
    %766 = vmatprep.subr.mxu0 0.0
    %767 = vmatpush1.msra.mxu0 0.0
    %768 = vmatprep.subr.mxu0 0.0
    %769 = vmatpush1.msra.mxu0 0.0
    %770 = vmatprep.subr.mxu0 0.0
    %771 = vmatpush1.msra.mxu0 0.0
    %772 = vmatprep.subr.mxu0 0.0
    %773 = vmatpush1.msra.mxu0 0.0
    %774 = vmatprep.subr.mxu0 0.0
    %775 = vmatpush1.msra.mxu0 0.0
    %776 = vmatprep.subr.mxu0 0.0
    %777 = vmatpush1.msra.mxu0 0.0
    %778 = vmatprep.subr.mxu0 0.0
    %779 = vmatpush1.msra.mxu0 0.0
    %780 = vmatprep.subr.mxu0 0.0
    %781 = vmatpush1.msra.mxu0 0.0
    %782 = vmatprep.subr.mxu0 0.0
    %783 = vmatpush1.msra.mxu0 0.0
    %784 = vmatprep.subr.mxu0 0.0
    %785 = vmatpush1.msra.mxu0 0.0
    %786 = vmatprep.subr.mxu0 0.0
    %787 = vmatpush1.msra.mxu0 0.0
    %788 = vmatprep.subr.mxu0 0.0
    %789 = vmatpush1.msra.mxu0 0.0
    %790 = vmatprep.subr.mxu0 0.0
    %791 = vmatpush1.msra.mxu0 0.0
    %792 = vmatprep.subr.mxu0 0.0
    %793 = vmatpush1.msra.mxu0 0.0
    %794 = vmatprep.subr.mxu0 0.0
    %795 = vmatpush1.msra.mxu0 0.0
    %796 = vmatprep.subr.mxu0 0.0
    %797 = vmatpush1.msra.mxu0 0.0
    %798 = vmatprep.subr.mxu0 0.0
    %799 = vmatpush1.msra.mxu0 0.0
    %800 = vmatprep.subr.mxu0 0.0
    %801 = vmatpush1.msra.mxu0 0.0
    %802 = vmatprep.subr.mxu0 0.0
    %803 = vmatpush1.msra.mxu0 0.0
    %804 = vmatprep.subr.mxu0 0.0
    %805 = vmatpush1.msra.mxu0 0.0
    %806 = vmatprep.subr.mxu0 0.0
    %807 = vmatpush1.msra.mxu0 0.0
    %808 = vmatprep.subr.mxu0 0.0
    %809 = vmatpush1.msra.mxu0 0.0
    %810 = vmatprep.subr.mxu0 0.0
    %811 = vmatpush1.msra.mxu0 0.0
    %812 = vmatprep.subr.mxu0 0.0
    %813 = vmatpush1.msra.mxu0 0.0
    %814 = vmatprep.subr.mxu0 0.0
    %815 = vmatpush1.msra.mxu0 0.0
    %816 = vmatprep.subr.mxu0 0.0
    %817 = vmatpush1.msra.mxu0 0.0
    %818 = vmatprep.subr.mxu0 0.0
    %819 = vmatpush1.msra.mxu0 0.0
    %820 = vmatprep.subr.mxu0 0.0
    %821 = vmatpush1.msra.mxu0 0.0
    %822 = vmatprep.mubr.f32.mxu0 0.0
    %823 = vmatmul.mubr.f32.gmra.mrb[0].mxu0 %v756
    %v824 = vpop.f32.mrb[0].mxu0
    %v825 = vadd.f32 0.0, %v824
    %v826 = vpop.f32.mrb[0].mxu0
    %827 = vdwg.mxu0
    %s828 = scalar_lea.vmem [#allocation2], 12
    %v829 = vld [vmem:[%s828] sm:$0x3]
    %v830 = vadd.f32 %v829, %v825
    %v831 = vxor.u32 %v830, 2147483648
    %v832 = vmul.f32 %v831, 1.442695
    %v833 = vpow.pop %v832
    %v834 = vadd.f32 %v833, 1.0
    %v835 = vrcp.pop %v834
    %v836 = vmul.f32 1.0, %v835
    %v837 = vadd.f32 %v825, %v156
    %839 = vrot.lane.b32.xlu0 %v837, 64
    %v840 = vpop.permute.xlu0 %839
    %v842 = vmul.f32 %v836, %v840
    %844 = vrot.lane.b32.xlu0 %v842, 64
    %v845 = vpop.permute.xlu0 %844
    %v847 = vadd.f32 %v829, %v845
    %v848 = vtanh.pop %v847
    %v849 = vsub.f32 1.0, %v836
    %851 = vrot.lane.b32.xlu0 %v848, 96
    %v852 = vpop.permute.xlu0 %851
    %v854 = vmul.f32 %v849, %v852
    %855 = vrot.lane.b32.xlu0 %v754, 32
    %v856 = vpop.permute.xlu0 %855
    %v858 = vmul.f32 %v836, %v856
    %v859 = vadd.f32 %v854, %v858
    %s860 = scalar_lea.vmem [#allocation5], 12
    %v861 = vld [vmem:[%s860] sm:$0x3]
    %v862 = vsub.f32 %v859, %v856
    %864 = vrot.lane.b32.xlu0 %v862, 96
    %v865 = vpop.permute.xlu0 %864
    %v867 = vmul.f32 %v861, %v865
    %v868 = vadd.f32 %v754, %v867
    %v870 = vsel %vm73, %v868, 0
    %872 = vmatprep.subr.mxu0 0.0
    %873 = vmatpush1.msra.mxu0 %v59
    %874 = vmatprep.subr.mxu0 0.0
    %875 = vmatpush1.msra.mxu0 %v61
    %876 = vmatprep.subr.mxu0 0.0
    %877 = vmatpush1.msra.mxu0 %v63
    %878 = vmatprep.subr.mxu0 0.0
    %879 = vmatpush1.msra.mxu0 %v65
    %880 = vmatprep.subr.mxu0 0.0
    %881 = vmatpush1.msra.mxu0 0.0
    %882 = vmatprep.subr.mxu0 0.0
    %883 = vmatpush1.msra.mxu0 0.0
    %884 = vmatprep.subr.mxu0 0.0
    %885 = vmatpush1.msra.mxu0 0.0
    %886 = vmatprep.subr.mxu0 0.0
    %887 = vmatpush1.msra.mxu0 0.0
    %888 = vmatprep.subr.mxu0 0.0
    %889 = vmatpush1.msra.mxu0 0.0
    %890 = vmatprep.subr.mxu0 0.0
    %891 = vmatpush1.msra.mxu0 0.0
    %892 = vmatprep.subr.mxu0 0.0
    %893 = vmatpush1.msra.mxu0 0.0
    %894 = vmatprep.subr.mxu0 0.0
    %895 = vmatpush1.msra.mxu0 0.0
    %896 = vmatprep.subr.mxu0 0.0
    %897 = vmatpush1.msra.mxu0 0.0
    %898 = vmatprep.subr.mxu0 0.0
    %899 = vmatpush1.msra.mxu0 0.0
    %900 = vmatprep.subr.mxu0 0.0
    %901 = vmatpush1.msra.mxu0 0.0
    %902 = vmatprep.subr.mxu0 0.0
    %903 = vmatpush1.msra.mxu0 0.0
    %904 = vmatprep.subr.mxu0 0.0
    %905 = vmatpush1.msra.mxu0 0.0
    %906 = vmatprep.subr.mxu0 0.0
    %907 = vmatpush1.msra.mxu0 0.0
    %908 = vmatprep.subr.mxu0 0.0
    %909 = vmatpush1.msra.mxu0 0.0
    %910 = vmatprep.subr.mxu0 0.0
    %911 = vmatpush1.msra.mxu0 0.0
    %912 = vmatprep.subr.mxu0 0.0
    %913 = vmatpush1.msra.mxu0 0.0
    %914 = vmatprep.subr.mxu0 0.0
    %915 = vmatpush1.msra.mxu0 0.0
    %916 = vmatprep.subr.mxu0 0.0
    %917 = vmatpush1.msra.mxu0 0.0
    %918 = vmatprep.subr.mxu0 0.0
    %919 = vmatpush1.msra.mxu0 0.0
    %920 = vmatprep.subr.mxu0 0.0
    %921 = vmatpush1.msra.mxu0 0.0
    %922 = vmatprep.subr.mxu0 0.0
    %923 = vmatpush1.msra.mxu0 0.0
    %924 = vmatprep.subr.mxu0 0.0
    %925 = vmatpush1.msra.mxu0 0.0
    %926 = vmatprep.subr.mxu0 0.0
    %927 = vmatpush1.msra.mxu0 0.0
    %928 = vmatprep.subr.mxu0 0.0
    %929 = vmatpush1.msra.mxu0 0.0
    %930 = vmatprep.subr.mxu0 0.0
    %931 = vmatpush1.msra.mxu0 0.0
    %932 = vmatprep.subr.mxu0 0.0
    %933 = vmatpush1.msra.mxu0 0.0
    %934 = vmatprep.subr.mxu0 0.0
    %935 = vmatpush1.msra.mxu0 0.0
    %936 = vmatprep.mubr.f32.mxu0 0.0
    %937 = vmatmul.mubr.f32.gmra.mrb[0].mxu0 %v870
    %v938 = vpop.f32.mrb[0].mxu0
    %v939 = vadd.f32 0.0, %v938
    %v940 = vpop.f32.mrb[0].mxu0
    %941 = vdwg.mxu0
    %s942 = scalar_lea.vmem [#allocation2], 14
    %v943 = vld [vmem:[%s942] sm:$0x3]
    %v944 = vadd.f32 %v943, %v939
    %v945 = vxor.u32 %v944, 2147483648
    %v946 = vmul.f32 %v945, 1.442695
    %v947 = vpow.pop %v946
    %v948 = vadd.f32 %v947, 1.0
    %v949 = vrcp.pop %v948
    %v950 = vmul.f32 1.0, %v949
    %v951 = vadd.f32 %v939, %v156
    %953 = vrot.lane.b32.xlu0 %v951, 64
    %v954 = vpop.permute.xlu0 %953
    %v956 = vmul.f32 %v950, %v954
    %958 = vrot.lane.b32.xlu0 %v956, 64
    %v959 = vpop.permute.xlu0 %958
    %v961 = vadd.f32 %v943, %v959
    %v962 = vtanh.pop %v961
    %v963 = vsub.f32 1.0, %v950
    %965 = vrot.lane.b32.xlu0 %v962, 96
    %v966 = vpop.permute.xlu0 %965
    %v968 = vmul.f32 %v963, %v966
    %969 = vrot.lane.b32.xlu0 %v868, 32
    %v970 = vpop.permute.xlu0 %969
    %v972 = vmul.f32 %v950, %v970
    %v973 = vadd.f32 %v968, %v972
    %s974 = scalar_lea.vmem [#allocation5], 14
    %v975 = vld [vmem:[%s974] sm:$0x3]
    %v976 = vsub.f32 %v973, %v970
    %978 = vrot.lane.b32.xlu0 %v976, 96
    %v979 = vpop.permute.xlu0 %978
    %v981 = vmul.f32 %v975, %v979
    %v982 = vadd.f32 %v868, %v981
    %v983 = vmax.f32 %v982, 0.0
    %988 = vrot.lane.b32.xlu0 %v59, 32
    %v989 = vpop.permute.xlu0 %988
    %990 = vrot.lane.b32.xlu0 %v61, 32
    %v991 = vpop.permute.xlu0 %990
    %992 = vrot.lane.b32.xlu0 %v63, 32
    %v993 = vpop.permute.xlu0 %992
    %994 = vrot.lane.b32.xlu0 %v65, 32
    %v995 = vpop.permute.xlu0 %994
    %1000 = vrot.lane.b32.xlu0 %v72, 96
    %v1001 = vpop.permute.xlu0 %1000
    %v1004 = vsel %vm73, %v983, 0
    %1006 = vmatprep.subr.mxu0 0.0
    %1007 = vmatpush1.msra.mxu0 %v989
    %1008 = vmatprep.subr.mxu0 0.0
    %1009 = vmatpush1.msra.mxu0 %v991
    %1010 = vmatprep.subr.mxu0 0.0
    %1011 = vmatpush1.msra.mxu0 %v993
    %1012 = vmatprep.subr.mxu0 0.0
    %1013 = vmatpush1.msra.mxu0 %v995
    %1014 = vmatprep.subr.mxu0 0.0
    %1015 = vmatpush1.msra.mxu0 0.0
    %1016 = vmatprep.subr.mxu0 0.0
    %1017 = vmatpush1.msra.mxu0 0.0
    %1018 = vmatprep.subr.mxu0 0.0
    %1019 = vmatpush1.msra.mxu0 0.0
    %1020 = vmatprep.subr.mxu0 0.0
    %1021 = vmatpush1.msra.mxu0 0.0
    %1022 = vmatprep.subr.mxu0 0.0
    %1023 = vmatpush1.msra.mxu0 0.0
    %1024 = vmatprep.subr.mxu0 0.0
    %1025 = vmatpush1.msra.mxu0 0.0
    %1026 = vmatprep.subr.mxu0 0.0
    %1027 = vmatpush1.msra.mxu0 0.0
    %1028 = vmatprep.subr.mxu0 0.0
    %1029 = vmatpush1.msra.mxu0 0.0
    %1030 = vmatprep.subr.mxu0 0.0
    %1031 = vmatpush1.msra.mxu0 0.0
    %1032 = vmatprep.subr.mxu0 0.0
    %1033 = vmatpush1.msra.mxu0 0.0
    %1034 = vmatprep.subr.mxu0 0.0
    %1035 = vmatpush1.msra.mxu0 0.0
    %1036 = vmatprep.subr.mxu0 0.0
    %1037 = vmatpush1.msra.mxu0 0.0
    %1038 = vmatprep.subr.mxu0 0.0
    %1039 = vmatpush1.msra.mxu0 0.0
    %1040 = vmatprep.subr.mxu0 0.0
    %1041 = vmatpush1.msra.mxu0 0.0
    %1042 = vmatprep.subr.mxu0 0.0
    %1043 = vmatpush1.msra.mxu0 0.0
    %1044 = vmatprep.subr.mxu0 0.0
    %1045 = vmatpush1.msra.mxu0 0.0
    %1046 = vmatprep.subr.mxu0 0.0
    %1047 = vmatpush1.msra.mxu0 0.0
    %1048 = vmatprep.subr.mxu0 0.0
    %1049 = vmatpush1.msra.mxu0 0.0
    %1050 = vmatprep.subr.mxu0 0.0
    %1051 = vmatpush1.msra.mxu0 0.0
    %1052 = vmatprep.subr.mxu0 0.0
    %1053 = vmatpush1.msra.mxu0 0.0
    %1054 = vmatprep.subr.mxu0 0.0
    %1055 = vmatpush1.msra.mxu0 0.0
    %1056 = vmatprep.subr.mxu0 0.0
    %1057 = vmatpush1.msra.mxu0 0.0
    %1058 = vmatprep.subr.mxu0 0.0
    %1059 = vmatpush1.msra.mxu0 0.0
    %1060 = vmatprep.subr.mxu0 0.0
    %1061 = vmatpush1.msra.mxu0 0.0
    %1062 = vmatprep.subr.mxu0 0.0
    %1063 = vmatpush1.msra.mxu0 0.0
    %1064 = vmatprep.subr.mxu0 0.0
    %1065 = vmatpush1.msra.mxu0 0.0
    %1066 = vmatprep.subr.mxu0 0.0
    %1067 = vmatpush1.msra.mxu0 0.0
    %1068 = vmatprep.subr.mxu0 0.0
    %1069 = vmatpush1.msra.mxu0 0.0
    %1070 = vmatprep.mubr.f32.mxu0 0.0
    %1071 = vmatmul.mubr.f32.gmra.mrb[0].mxu0 %v1004
    %v1072 = vpop.f32.mrb[0].mxu0
    %v1073 = vadd.f32 %v1001, %v1072
    %v1074 = vpop.f32.mrb[0].mxu0
    %1075 = vdwg.mxu0
    %v1076 = vlaneseq
    %v1077 = vshrl.u32 %v1076, 7
    %v1078 = vsub.s32 1, %v1077
    %v1079 = vrot.slane %v67, %v1078
    %1080 = vrot.lane.b32.xlu0 %v1079, 64
    %v1081 = vpop.permute.xlu0 %1080
    %vm1082 = vcmask 523264
    %v1083 = vsel %vm1082, %v156, %v1081
    %v1086 = vsel %vm73, %v1073, 0
    %1088 = vmatprep.subr.mxu0 0.0
    %1089 = vmatpush1.msra.mxu0 %v60
    %1090 = vmatprep.subr.mxu0 0.0
    %1091 = vmatpush1.msra.mxu0 %v62
    %1092 = vmatprep.subr.mxu0 0.0
    %1093 = vmatpush1.msra.mxu0 %v64
    %1094 = vmatprep.subr.mxu0 0.0
    %1095 = vmatpush1.msra.mxu0 %v66
    %1096 = vmatprep.subr.mxu0 0.0
    %1097 = vmatpush1.msra.mxu0 0.0
    %1098 = vmatprep.subr.mxu0 0.0
    %1099 = vmatpush1.msra.mxu0 0.0
    %1100 = vmatprep.subr.mxu0 0.0
    %1101 = vmatpush1.msra.mxu0 0.0
    %1102 = vmatprep.subr.mxu0 0.0
    %1103 = vmatpush1.msra.mxu0 0.0
    %1104 = vmatprep.subr.mxu0 0.0
    %1105 = vmatpush1.msra.mxu0 0.0
    %1106 = vmatprep.subr.mxu0 0.0
    %1107 = vmatpush1.msra.mxu0 0.0
    %1108 = vmatprep.subr.mxu0 0.0
    %1109 = vmatpush1.msra.mxu0 0.0
    %1110 = vmatprep.subr.mxu0 0.0
    %1111 = vmatpush1.msra.mxu0 0.0
    %1112 = vmatprep.subr.mxu0 0.0
    %1113 = vmatpush1.msra.mxu0 0.0
    %1114 = vmatprep.subr.mxu0 0.0
    %1115 = vmatpush1.msra.mxu0 0.0
    %1116 = vmatprep.subr.mxu0 0.0
    %1117 = vmatpush1.msra.mxu0 0.0
    %1118 = vmatprep.subr.mxu0 0.0
    %1119 = vmatpush1.msra.mxu0 0.0
    %1120 = vmatprep.subr.mxu0 0.0
    %1121 = vmatpush1.msra.mxu0 0.0
    %1122 = vmatprep.subr.mxu0 0.0
    %1123 = vmatpush1.msra.mxu0 0.0
    %1124 = vmatprep.subr.mxu0 0.0
    %1125 = vmatpush1.msra.mxu0 0.0
    %1126 = vmatprep.subr.mxu0 0.0
    %1127 = vmatpush1.msra.mxu0 0.0
    %1128 = vmatprep.subr.mxu0 0.0
    %1129 = vmatpush1.msra.mxu0 0.0
    %1130 = vmatprep.subr.mxu0 0.0
    %1131 = vmatpush1.msra.mxu0 0.0
    %1132 = vmatprep.subr.mxu0 0.0
    %1133 = vmatpush1.msra.mxu0 0.0
    %1134 = vmatprep.subr.mxu0 0.0
    %1135 = vmatpush1.msra.mxu0 0.0
    %1136 = vmatprep.subr.mxu0 0.0
    %1137 = vmatpush1.msra.mxu0 0.0
    %1138 = vmatprep.subr.mxu0 0.0
    %1139 = vmatpush1.msra.mxu0 0.0
    %1140 = vmatprep.subr.mxu0 0.0
    %1141 = vmatpush1.msra.mxu0 0.0
    %1142 = vmatprep.subr.mxu0 0.0
    %1143 = vmatpush1.msra.mxu0 0.0
    %1144 = vmatprep.subr.mxu0 0.0
    %1145 = vmatpush1.msra.mxu0 0.0
    %1146 = vmatprep.subr.mxu0 0.0
    %1147 = vmatpush1.msra.mxu0 0.0
    %1148 = vmatprep.subr.mxu0 0.0
    %1149 = vmatpush1.msra.mxu0 0.0
    %1150 = vmatprep.subr.mxu0 0.0
    %1151 = vmatpush1.msra.mxu0 0.0
    %1152 = vmatprep.mubr.f32.mxu0 0.0
    %1153 = vmatmul.mubr.f32.gmra.mrb[0].mxu0 %v1086
    %v1154 = vpop.f32.mrb[0].mxu0
    %v1155 = vadd.f32 %v1083, %v1154
    %v1156 = vpop.f32.mrb[0].mxu0
    %1157 = vdwg.mxu0
    %1158 = vst [vmem:[#allocation8] sm:$0x3] %v1155
    // Predicated region
    $region30: #{tpu_custom_call.1} parent=1 // pred_check
      _
    $region31: #{tpu_custom_call.1} parent=1 // pred_check_branch
      %1160 = sbr.rel (0) target = $region33
    $region32: #{tpu_custom_call.1} parent=1 // pred_region
      %s1162 = ssub.s32 32, 32
      %1163 = vsyncadd [#allocation4], %s1162
      %s1165 = sshll.u32 [#allocation8], 4
      %s1166 = int_to_ptr.vmem [resolvable:$true] %s1165
      %1168 = dma.vmem_to_hbm [thread:$0]  %s1166, 32, %s4, [#allocation4]
    $region33: #{tpu_custom_call.1} parent=1 // pred_fallthru
      _
    // Predicated region
    $region34: #{tpu_custom_call.1} parent=1 // pred_check
      _
    $region35: #{tpu_custom_call.1} parent=1 // pred_check_branch
      %1170 = sbr.rel (0) target = $region37
    $region36: #{tpu_custom_call.1} parent=1 // pred_region
      %1171 = dma.done [#allocation4], 32
    $region37: #{tpu_custom_call.1} parent=1 // pred_fallthru
      _
    %1172 = vsyncpa [#allocation3], 1
    %1173 = vsyncpa [#allocation6], 1
    %1174 = vsyncpa [#allocation4], 1

</llo_original>
